<compile_context>
chip_gen: v5e
topology: v5e:2x2
jax: 0.10.0
libtpu: 0.0.40
codegen_flags: <defaults>
</compile_context>

<pallas_src>
import functools

import numpy as np
import jax
import jax.numpy as jnp
from jax.experimental import pallas as pl
from jax.experimental.pallas import tpu as pltpu


def _log_sigmoid(x):
    # numerically stable log(sigmoid(x)) = min(x, 0) - log(1 + exp(-|x|))
    return jnp.minimum(x, 0.0) - jnp.log(1.0 + jnp.exp(-jnp.abs(x)))


def _oracle_block_kernel(x_ref, e_ref, oh_ref, fill_ref, cwd_ref, tri_ref,
                         pen_ref, w_ref, b_ref, out_ref, *, TB, N, K, C, Ts):
    """Processes TB target steps per grid iteration; writes one packed output.

    out_ref block: (TB, 6, N, Ts) with channels [E, gamma, gamma_unif, cumsum,
    Cread, Cwrite].
    """
    f32 = jnp.float32
    neg_inf = f32(-jnp.inf)

    e = e_ref[...]              # (TB, N, K)
    oh = oh_ref[...]            # (TB, K, Ts)  one-hot of indices
    fill = fill_ref[...]        # (TB, 1, Ts)  count of contexts per src pos
    cw_default = cwd_ref[...]   # (TB, 1, Ts)  precomputed triu(.,1) mask
    tri = tri_ref[...]          # (Ts, Ts)     precomputed cumsum matrix
    pen = pen_ref[...]          # (1, Ts)      precomputed penalty * arange(Ts)
    w = w_ref[0]                # (C,)
    b = b_ref[0, 0]             # scalar (SMEM)

    # ---- gate linear + logsigmoid pair (controls) ----
    # (self.detach only stops gradients in PyTorch; forward values identical.)
    # Kept as rank-3 multiply + lane reduce per target step: at C=32 moving it
    # onto the MXU would require a sublane<->lane relayout costing more than it
    # saves; the static TB loop unrolls into one fused block.
    logits = []
    for tb in range(TB):
        xt = x_ref[tb]                                        # (N, K, C)
        logits.append(jnp.sum(xt * w[None, None, :], axis=-1) + b)
    logit = jnp.stack(logits, axis=0)                         # (TB, N, K)
    s = _log_sigmoid(logit)
    cs_read = s                                               # log sigma
    cs_write = s - logit                                      # log(1 - sigma)

    # ---- scatter onto the source grid via batched one-hot matmuls (MXU) ----
    E = jnp.einsum('bnk,bks->bns', e, oh, preferred_element_type=f32)
    cr = jnp.einsum('bnk,bks->bns', cs_read, oh, preferred_element_type=f32)
    cw_s = jnp.einsum('bnk,bks->bns', cs_write, oh, preferred_element_type=f32)

    filled = fill > 0.0                                       # (TB, 1, Ts)
    E = jnp.where(filled, E, neg_inf)                         # unfilled -> -inf
    cw = jnp.where(filled, cw_s, cw_default)                  # Cread default is 0

    # ---- uniform gamma over filled source positions ----
    fill_f = filled.astype(f32)
    gu = fill_f / jnp.sum(fill_f, axis=-1, keepdims=True)     # (TB, 1, Ts)
    gu = jnp.broadcast_to(gu, (TB, N, Ts))

    # ---- penalized softmax over source positions (max-shifted for stability) ----
    z = E - pen[None]                                         # (TB, N, Ts)
    m = jnp.max(z, axis=-1, keepdims=True)
    g = jnp.where(filled, jnp.exp(z - m), 0.0)
    g = g / jnp.sum(g, axis=-1, keepdims=True)

    # ---- cumulative sum over source via upper-triangular matmul (MXU) ----
    tri_b = jnp.broadcast_to(tri, (TB, Ts, Ts))
    cum = jnp.einsum('bns,bst->bnt', g, tri_b, preferred_element_type=f32)

    # ---- single packed output tile -> one contiguous output DMA per block ----
    out_ref[:, 0, :, :] = E
    out_ref[:, 1, :, :] = g
    out_ref[:, 2, :, :] = gu
    out_ref[:, 3, :, :] = cum
    out_ref[:, 4, :, :] = cr
    out_ref[:, 5, :, :] = cw


def _pick_tb(Tt, max_tb=8):
    """Largest divisor of Tt (<= max_tb) that keeps grid length >= 2 (megacore)."""
    tb = 1
    for cand in range(1, min(Tt, max_tb) + 1):
        if Tt % cand == 0 and (Tt // cand) >= 2:
            tb = cand
    return tb


def likelihood_oracle_controls_gamma(x, emissions_sub, indices, src_length,
                                     gate_w, gate_b, penalty,
                                     infer_gamma_from_read=True, src_mask=None,
                                     block_tgt=None):
    """Pallas implementation of LikelihoodOracleControls.forward (mode='gamma')."""
    del src_mask  # unused in the gamma path (as in PyTorch)
    Tt, N, K, C = x.shape
    Ts = int(src_length)
    f32 = jnp.float32

    TB = _pick_tb(Tt) if block_tgt is None else int(block_tgt)
    assert Tt % TB == 0, "block_tgt must divide the number of target steps"
    grid_len = Tt // TB

    x = x.astype(f32)
    emissions_sub = emissions_sub.astype(f32)
    onehot = jax.nn.one_hot(indices, Ts, dtype=f32)                    # (Tt, K, Ts)
    fill = jnp.sum(onehot, axis=1, keepdims=True)                      # (Tt, 1, Ts)
    w2d = jnp.asarray(gate_w, f32).reshape(1, C)
    b2d = jnp.asarray(gate_b, f32).reshape(1, 1)

    # loop-invariant / per-step constants, hoisted out of the kernel body
    tri = jnp.triu(jnp.ones((Ts, Ts), f32))                            # cumsum matrix
    pen_row = (float(penalty) * jnp.arange(Ts, dtype=f32)).reshape(1, Ts)
    t_idx = jnp.arange(Tt, dtype=jnp.int32)[:, None]
    s_idx = jnp.arange(Ts, dtype=jnp.int32)[None, :]
    cw_default = jnp.where(s_idx > t_idx, 0.0, -jnp.inf).astype(f32)[:, None, :]

    kernel = functools.partial(_oracle_block_kernel, TB=TB, N=N, K=K, C=C, Ts=Ts)
    grid_spec = pltpu.PrefetchScalarGridSpec(
        num_scalar_prefetch=0,
        grid=(grid_len,),
        in_specs=[
            pl.BlockSpec((TB, N, K, C), lambda i: (i, 0, 0, 0)),        # x
            pl.BlockSpec((TB, N, K), lambda i: (i, 0, 0)),              # emissions
            pl.BlockSpec((TB, K, Ts), lambda i: (i, 0, 0)),             # one-hot
            pl.BlockSpec((TB, 1, Ts), lambda i: (i, 0, 0)),             # fill counts
            pl.BlockSpec((TB, 1, Ts), lambda i: (i, 0, 0)),             # Cwrite default
            pl.BlockSpec((Ts, Ts), lambda i: (0, 0)),                   # tri (invariant)
            pl.BlockSpec((1, Ts), lambda i: (0, 0)),                    # penalty row
            pl.BlockSpec((1, C), lambda i: (0, 0)),                     # gate weight
            pl.BlockSpec((1, 1), lambda i: (0, 0),
                         memory_space=pltpu.MemorySpace.SMEM),          # gate bias
        ],
        out_specs=pl.BlockSpec((TB, 6, N, Ts), lambda i: (i, 0, 0, 0)),
    )
    packed = pl.pallas_call(
        kernel,
        out_shape=jax.ShapeDtypeStruct((Tt, 6, N, Ts), f32),
        grid_spec=grid_spec,
        compiler_params=pltpu.CompilerParams(
            dimension_semantics=("parallel",)),
    )(x, emissions_sub, onehot, fill, cw_default, tri, pen_row, w2d, b2d)

    E = packed[:, 0]
    gamma = packed[:, 1]
    gamma_unif = packed[:, 2]
    cum = packed[:, 3]
    cr = packed[:, 4]
    cw = packed[:, 5]

    # read/write are a single subtract on already-computed grids -> XLA glue
    # (the previous dedicated pallas_call added pure launch/DMA overhead).
    write = gamma[1:]
    read = cum[:-1] - write
    controls = jnp.stack([cr, cw], axis=-1)[:-1]                        # (Tt-1, N, Ts, 2)
    gamma_sel = gamma if infer_gamma_from_read else gamma_unif
    return E, gamma_sel, controls, read, write


def _reference(x, e_sub, indices, Ts, w, b, penalty, infer_gamma_from_read):
    """Pure-JAX reimplementation of the PyTorch forward_gamma for validation."""
    Tt, N, K, C = x.shape
    f32 = jnp.float32
    logit = jnp.sum(x * w[None, None, None, :], axis=-1) + b
    s = _log_sigmoid(logit)
    cs, cx = s, s - logit
    oh = jax.nn.one_hot(indices, Ts, dtype=f32)                  # (Tt, K, Ts)
    fill = oh.sum(1) > 0                                         # (Tt, Ts)
    E = jnp.einsum('tnk,tks->tns', e_sub, oh)
    E = jnp.where(fill[:, None, :], E, -jnp.inf)
    Cr = jnp.einsum('tnk,tks->tns', cs, oh)
    tvec = jnp.arange(Tt)[:, None]
    svec = jnp.arange(Ts)
    default_w = jnp.where(svec[None, :] > tvec, 0.0, -jnp.inf)   # (Tt, Ts)
    Cw = jnp.where(fill[:, None, :],
                   jnp.einsum('tnk,tks->tns', cx, oh),
                   default_w[:, None, :])
    gu = fill.astype(f32)
    gu = gu / gu.sum(-1, keepdims=True)
    gu = jnp.broadcast_to(gu[:, None, :], (Tt, N, Ts))
    g = jnp.where(fill[:, None, :],
                  jnp.exp(E - penalty * svec[None, None, :].astype(f32)), 0.0)
    g = g / g.sum(-1, keepdims=True)
    cum = jnp.cumsum(g, -1)
    write = g[1:]
    read = cum[:-1] - write
    C_grid = jnp.stack([Cr, Cw], -1)
    gamma_sel = g if infer_gamma_from_read else gu
    return E, gamma_sel, C_grid[:-1], read, write


if __name__ == "__main__":
    # full-precision f32 matmuls in both the XLA reference and the kernel
    jax.config.update("jax_default_matmul_precision", "highest")

    Tt, N, K, C = 6, 2, 8, 32    # tgt steps, batch, contexts/step, hidden
    Ts = 16                      # src length
    penalty = 0.1
    infer_gamma_from_read = True

    key = jax.random.PRNGKey(0)
    kx, ke, kw = jax.random.split(key, 3)
    x = jax.random.normal(kx, (Tt, N, K, C), jnp.float32)
    emissions_sub = jax.random.normal(ke, (Tt, N, K), jnp.float32) - 2.0
    # unique source indices per target step
    indices = ((jnp.arange(K)[None, :] + jnp.arange(Tt)[:, None]) % Ts).astype(jnp.int32)

    # deterministic init: nn.Linear(C, 1) with xavier_uniform weight, zero bias
    bound = float(np.sqrt(6.0 / (C + 1)))
    gate_w = jax.random.uniform(kw, (C,), jnp.float32, -bound, bound)
    gate_b = 0.0

    outs = likelihood_oracle_controls_gamma(
        x, emissions_sub, indices, Ts, gate_w, gate_b, penalty,
        infer_gamma_from_read=infer_gamma_from_read)
    outs = jax.block_until_ready(outs)

    refs = _reference(x, emissions_sub, indices, Ts, gate_w, gate_b, penalty,
                      infer_gamma_from_read)
    for got, want in zip(outs, refs):
        np.testing.assert_allclose(np.asarray(got), np.asarray(want),
                                   rtol=1e-4, atol=1e-5)
    print("KERNEL_OK")
</pallas_src>

<mosaic_0001>
module attributes {stable_mosaic.version = 11 : i64} {
  func.func @_oracle_block_kernel(%arg0: i32, %arg1: memref<3x2x8x32xf32, #tpu.memory_space<vmem>>, %arg2: memref<3x2x8xf32, #tpu.memory_space<vmem>>, %arg3: memref<3x8x16xf32, #tpu.memory_space<vmem>>, %arg4: memref<3x1x16xf32, #tpu.memory_space<vmem>>, %arg5: memref<3x1x16xf32, #tpu.memory_space<vmem>>, %arg6: memref<16x16xf32, #tpu.memory_space<vmem>>, %arg7: memref<1x16xf32, #tpu.memory_space<vmem>>, %arg8: memref<1x32xf32, #tpu.memory_space<vmem>>, %arg9: memref<1x1xf32, #tpu.memory_space<smem>>, %arg10: memref<3x6x2x16xf32, #tpu.memory_space<vmem>>) attributes {dimension_semantics = [#tpu.dimension_semantics<parallel>], iteration_bounds = array<i64: 2>, scalar_prefetch = 0 : i64, scratch_operands = 0 : i64, tpu.core_type = #tpu.core_type<tc>, window_params = [{transform_indices = @transform_0, window_bounds = array<i64: 3, 2, 8, 32>}, {transform_indices = @transform_1, window_bounds = array<i64: 3, 2, 8>}, {transform_indices = @transform_2, window_bounds = array<i64: 3, 8, 16>}, {transform_indices = @transform_3, window_bounds = array<i64: 3, 1, 16>}, {transform_indices = @transform_4, window_bounds = array<i64: 3, 1, 16>}, {pipeline_mode = #tpu.pipeline_mode<synchronous>, transform_indices = @transform_5, window_bounds = array<i64: 16, 16>}, {pipeline_mode = #tpu.pipeline_mode<synchronous>, transform_indices = @transform_6, window_bounds = array<i64: 1, 16>}, {pipeline_mode = #tpu.pipeline_mode<synchronous>, transform_indices = @transform_7, window_bounds = array<i64: 1, 32>}, {transform_indices = @transform_8, window_bounds = array<i64: 1, 1>}, {transform_indices = @transform_9, window_bounds = array<i64: 3, 6, 2, 16>}]} {
    %c0 = arith.constant 0 : index
    %c0_0 = arith.constant 0 : index
    %c0_1 = arith.constant 0 : index
    %0 = vector.load %arg2[%c0, %c0_0, %c0_1] : memref<3x2x8xf32, #tpu.memory_space<vmem>>, vector<3x2x8xf32>
    %c0_2 = arith.constant 0 : index
    %c0_3 = arith.constant 0 : index
    %c0_4 = arith.constant 0 : index
    %1 = vector.load %arg3[%c0_2, %c0_3, %c0_4] : memref<3x8x16xf32, #tpu.memory_space<vmem>>, vector<3x8x16xf32>
    %c0_5 = arith.constant 0 : index
    %c0_6 = arith.constant 0 : index
    %c0_7 = arith.constant 0 : index
    %2 = vector.load %arg4[%c0_5, %c0_6, %c0_7] : memref<3x1x16xf32, #tpu.memory_space<vmem>>, vector<3x1x16xf32>
    %c0_8 = arith.constant 0 : index
    %c0_9 = arith.constant 0 : index
    %c0_10 = arith.constant 0 : index
    %3 = vector.load %arg5[%c0_8, %c0_9, %c0_10] : memref<3x1x16xf32, #tpu.memory_space<vmem>>, vector<3x1x16xf32>
    %c0_11 = arith.constant 0 : index
    %c0_12 = arith.constant 0 : index
    %4 = vector.load %arg6[%c0_11, %c0_12] : memref<16x16xf32, #tpu.memory_space<vmem>>, vector<16x16xf32>
    %c0_13 = arith.constant 0 : index
    %c0_14 = arith.constant 0 : index
    %5 = vector.load %arg7[%c0_13, %c0_14] : memref<1x16xf32, #tpu.memory_space<vmem>>, vector<1x16xf32>
    %c0_15 = arith.constant 0 : index
    %c0_16 = arith.constant 0 : index
    %6 = vector.load %arg8[%c0_15, %c0_16] : memref<1x32xf32, #tpu.memory_space<vmem>>, vector<1x32xf32>
    %7 = vector.shape_cast %6 : vector<1x32xf32> to vector<32xf32>
    %c0_17 = arith.constant 0 : index
    %c0_18 = arith.constant 0 : index
    %8 = memref.load %arg9[%c0_17, %c0_18] : memref<1x1xf32, #tpu.memory_space<smem>>
    %c0_19 = arith.constant 0 : index
    %c0_20 = arith.constant 0 : index
    %c0_21 = arith.constant 0 : index
    %c0_22 = arith.constant 0 : index
    %9 = vector.load %arg1[%c0_19, %c0_20, %c0_21, %c0_22] : memref<3x2x8x32xf32, #tpu.memory_space<vmem>>, vector<1x2x8x32xf32>
    %10 = vector.shape_cast %9 : vector<1x2x8x32xf32> to vector<2x8x32xf32>
    %11 = vector.shape_cast %7 : vector<32xf32> to vector<1x1x32xf32>
    %12 = vector.broadcast %11 : vector<1x1x32xf32> to vector<2x8x32xf32>
    %13 = arith.mulf %10, %12 : vector<2x8x32xf32>
    %cst = arith.constant dense<0.000000e+00> : vector<2x8xf32>
    %14 = vector.multi_reduction <add>, %13, %cst [2] : vector<2x8x32xf32> to vector<2x8xf32>
    %15 = vector.broadcast %8 : f32 to vector<2x8xf32>
    %16 = arith.addf %14, %15 : vector<2x8xf32>
    %c1 = arith.constant 1 : index
    %c0_23 = arith.constant 0 : index
    %c0_24 = arith.constant 0 : index
    %c0_25 = arith.constant 0 : index
    %17 = vector.load %arg1[%c1, %c0_23, %c0_24, %c0_25] : memref<3x2x8x32xf32, #tpu.memory_space<vmem>>, vector<1x2x8x32xf32>
    %18 = vector.shape_cast %17 : vector<1x2x8x32xf32> to vector<2x8x32xf32>
    %19 = vector.shape_cast %7 : vector<32xf32> to vector<1x1x32xf32>
    %20 = vector.broadcast %19 : vector<1x1x32xf32> to vector<2x8x32xf32>
    %21 = arith.mulf %18, %20 : vector<2x8x32xf32>
    %cst_26 = arith.constant dense<0.000000e+00> : vector<2x8xf32>
    %22 = vector.multi_reduction <add>, %21, %cst_26 [2] : vector<2x8x32xf32> to vector<2x8xf32>
    %23 = vector.broadcast %8 : f32 to vector<2x8xf32>
    %24 = arith.addf %22, %23 : vector<2x8xf32>
    %c2 = arith.constant 2 : index
    %c0_27 = arith.constant 0 : index
    %c0_28 = arith.constant 0 : index
    %c0_29 = arith.constant 0 : index
    %25 = vector.load %arg1[%c2, %c0_27, %c0_28, %c0_29] : memref<3x2x8x32xf32, #tpu.memory_space<vmem>>, vector<1x2x8x32xf32>
    %26 = vector.shape_cast %25 : vector<1x2x8x32xf32> to vector<2x8x32xf32>
    %27 = vector.shape_cast %7 : vector<32xf32> to vector<1x1x32xf32>
    %28 = vector.broadcast %27 : vector<1x1x32xf32> to vector<2x8x32xf32>
    %29 = arith.mulf %26, %28 : vector<2x8x32xf32>
    %cst_30 = arith.constant dense<0.000000e+00> : vector<2x8xf32>
    %30 = vector.multi_reduction <add>, %29, %cst_30 [2] : vector<2x8x32xf32> to vector<2x8xf32>
    %31 = vector.broadcast %8 : f32 to vector<2x8xf32>
    %32 = arith.addf %30, %31 : vector<2x8xf32>
    %33 = vector.shape_cast %16 : vector<2x8xf32> to vector<1x2x8xf32>
    %34 = vector.shape_cast %24 : vector<2x8xf32> to vector<1x2x8xf32>
    %35 = vector.shape_cast %32 : vector<2x8xf32> to vector<1x2x8xf32>
    %36 = tpu.concatenate %33, %34, %35 in 0 : vector<1x2x8xf32>, vector<1x2x8xf32>, vector<1x2x8xf32> -> vector<3x2x8xf32>
    %cst_31 = arith.constant 0.000000e+00 : f32
    %37 = vector.broadcast %cst_31 : f32 to vector<3x2x8xf32>
    %38 = arith.minimumf %36, %37 : vector<3x2x8xf32>
    %39 = math.absf %36 : vector<3x2x8xf32>
    %cst_32 = arith.constant 0.000000e+00 : f32
    %40 = vector.broadcast %cst_32 : f32 to vector<3x2x8xf32>
    %41 = arith.subf %40, %39 : vector<3x2x8xf32>
    %42 = math.exp %41 : vector<3x2x8xf32>
    %cst_33 = arith.constant 1.000000e+00 : f32
    %43 = vector.broadcast %cst_33 : f32 to vector<3x2x8xf32>
    %44 = arith.addf %43, %42 : vector<3x2x8xf32>
    %45 = math.log %44 : vector<3x2x8xf32>
    %46 = arith.subf %38, %45 : vector<3x2x8xf32>
    %47 = arith.subf %46, %36 : vector<3x2x8xf32>
    "tpu.trace_start"() <{level = 10 : i32, message = "bnk,bks->bns"}> : () -> ()
    %cst_34 = arith.constant dense<0.000000e+00> : vector<3x2x16xf32>
    %48 = tpu.matmul %0, %1, %cst_34 {dimension_numbers = #tpu.dot_dimension_numbers<[2], [1], [1], [2], [0, 0, 0, 1, 1, 2], [0], [0]>, precision = #tpu.contract_precision<fp32>} : vector<3x2x8xf32>, vector<3x8x16xf32>, vector<3x2x16xf32> -> vector<3x2x16xf32>
    %cst_35 = arith.constant dense<0.000000e+00> : vector<3x2x16xf32>
    %49 = tpu.matmul %46, %1, %cst_35 {dimension_numbers = #tpu.dot_dimension_numbers<[2], [1], [1], [2], [0, 0, 0, 1, 1, 2], [0], [0]>, precision = #tpu.contract_precision<fp32>} : vector<3x2x8xf32>, vector<3x8x16xf32>, vector<3x2x16xf32> -> vector<3x2x16xf32>
    %cst_36 = arith.constant dense<0.000000e+00> : vector<3x2x16xf32>
    %50 = tpu.matmul %47, %1, %cst_36 {dimension_numbers = #tpu.dot_dimension_numbers<[2], [1], [1], [2], [0, 0, 0, 1, 1, 2], [0], [0]>, precision = #tpu.contract_precision<fp32>} : vector<3x2x8xf32>, vector<3x8x16xf32>, vector<3x2x16xf32> -> vector<3x2x16xf32>
    %cst_37 = arith.constant 0.000000e+00 : f32
    "tpu.trace_stop"() : () -> ()
    %51 = vector.broadcast %cst_37 : f32 to vector<3x1x16xf32>
    %52 = arith.cmpf ogt, %2, %51 : vector<3x1x16xf32>
    %cst_38 = arith.constant 0xFF800000 : f32
    %53 = vector.shape_cast %52 : vector<3x1x16xi1> to vector<3x1x16xi1>
    %54 = vector.broadcast %53 : vector<3x1x16xi1> to vector<3x2x16xi1>
    %55 = vector.broadcast %cst_38 : f32 to vector<3x2x16xf32>
    %56 = arith.select %54, %48, %55 : vector<3x2x16xi1>, vector<3x2x16xf32>
    %57 = vector.shape_cast %52 : vector<3x1x16xi1> to vector<3x1x16xi1>
    %58 = vector.broadcast %57 : vector<3x1x16xi1> to vector<3x2x16xi1>
    %59 = vector.shape_cast %3 : vector<3x1x16xf32> to vector<3x1x16xf32>
    %60 = vector.broadcast %59 : vector<3x1x16xf32> to vector<3x2x16xf32>
    %61 = arith.select %58, %50, %60 : vector<3x2x16xi1>, vector<3x2x16xf32>
    %62 = arith.extui %52 : vector<3x1x16xi1> to vector<3x1x16xi32>
    %63 = arith.sitofp %62 : vector<3x1x16xi32> to vector<3x1x16xf32>
    %cst_39 = arith.constant dense<0.000000e+00> : vector<3x1xf32>
    %64 = vector.multi_reduction <add>, %63, %cst_39 [2] : vector<3x1x16xf32> to vector<3x1xf32>
    %65 = vector.shape_cast %64 : vector<3x1xf32> to vector<3x1x1xf32>
    %66 = vector.broadcast %65 : vector<3x1x1xf32> to vector<3x1x16xf32>
    %67 = arith.divf %63, %66 : vector<3x1x16xf32>
    %68 = vector.shape_cast %67 : vector<3x1x16xf32> to vector<3x1x16xf32>
    %69 = vector.broadcast %68 : vector<3x1x16xf32> to vector<3x2x16xf32>
    %70 = vector.shape_cast %5 : vector<1x16xf32> to vector<1x1x16xf32>
    %71 = vector.broadcast %70 : vector<1x1x16xf32> to vector<3x2x16xf32>
    %72 = arith.subf %56, %71 : vector<3x2x16xf32>
    %cst_40 = arith.constant dense<0xFF800000> : vector<3x2xf32>
    %73 = vector.multi_reduction <maximumf>, %72, %cst_40 [2] : vector<3x2x16xf32> to vector<3x2xf32>
    %74 = vector.shape_cast %73 : vector<3x2xf32> to vector<3x2x1xf32>
    %75 = vector.broadcast %74 : vector<3x2x1xf32> to vector<3x2x16xf32>
    %76 = arith.subf %72, %75 : vector<3x2x16xf32>
    %77 = math.exp %76 : vector<3x2x16xf32>
    %cst_41 = arith.constant 0.000000e+00 : f32
    %78 = vector.shape_cast %52 : vector<3x1x16xi1> to vector<3x1x16xi1>
    %79 = vector.broadcast %78 : vector<3x1x16xi1> to vector<3x2x16xi1>
    %80 = vector.broadcast %cst_41 : f32 to vector<3x2x16xf32>
    %81 = arith.select %79, %77, %80 : vector<3x2x16xi1>, vector<3x2x16xf32>
    %cst_42 = arith.constant dense<0.000000e+00> : vector<3x2xf32>
    %82 = vector.multi_reduction <add>, %81, %cst_42 [2] : vector<3x2x16xf32> to vector<3x2xf32>
    %83 = vector.shape_cast %82 : vector<3x2xf32> to vector<3x2x1xf32>
    %84 = vector.broadcast %83 : vector<3x2x1xf32> to vector<3x2x16xf32>
    %85 = arith.divf %81, %84 : vector<3x2x16xf32>
    %86 = vector.shape_cast %4 : vector<16x16xf32> to vector<1x16x16xf32>
    %87 = vector.broadcast %86 : vector<1x16x16xf32> to vector<3x16x16xf32>
    "tpu.trace_start"() <{level = 10 : i32, message = "bns,bst->bnt"}> : () -> ()
    %cst_43 = arith.constant dense<0.000000e+00> : vector<3x2x16xf32>
    %88 = tpu.matmul %85, %87, %cst_43 {dimension_numbers = #tpu.dot_dimension_numbers<[2], [1], [1], [2], [0, 0, 0, 1, 1, 2], [0], [0]>, precision = #tpu.contract_precision<fp32>} : vector<3x2x16xf32>, vector<3x16x16xf32>, vector<3x2x16xf32> -> vector<3x2x16xf32>
    "tpu.trace_stop"() : () -> ()
    %c0_44 = arith.constant 0 : index
    %c0_45 = arith.constant 0 : index
    %c0_46 = arith.constant 0 : index
    %c0_47 = arith.constant 0 : index
    %89 = vector.load %arg10[%c0_44, %c0_45, %c0_46, %c0_47] : memref<3x6x2x16xf32, #tpu.memory_space<vmem>>, vector<3x1x2x16xf32>
    %90 = vector.shape_cast %89 : vector<3x1x2x16xf32> to vector<3x2x16xf32>
    %91 = vector.shape_cast %56 : vector<3x2x16xf32> to vector<3x1x2x16xf32>
    tpu.vector_store %arg10[%c0_44, %c0_45, %c0_46, %c0_47], %91 {strides = array<i32>} : memref<3x6x2x16xf32, #tpu.memory_space<vmem>>, vector<3x1x2x16xf32>,
    %c0_48 = arith.constant 0 : index
    %c1_49 = arith.constant 1 : index
    %c0_50 = arith.constant 0 : index
    %c0_51 = arith.constant 0 : index
    %92 = vector.load %arg10[%c0_48, %c1_49, %c0_50, %c0_51] : memref<3x6x2x16xf32, #tpu.memory_space<vmem>>, vector<3x1x2x16xf32>
    %93 = vector.shape_cast %92 : vector<3x1x2x16xf32> to vector<3x2x16xf32>
    %94 = vector.shape_cast %85 : vector<3x2x16xf32> to vector<3x1x2x16xf32>
    tpu.vector_store %arg10[%c0_48, %c1_49, %c0_50, %c0_51], %94 {strides = array<i32>} : memref<3x6x2x16xf32, #tpu.memory_space<vmem>>, vector<3x1x2x16xf32>,
    %c0_52 = arith.constant 0 : index
    %c2_53 = arith.constant 2 : index
    %c0_54 = arith.constant 0 : index
    %c0_55 = arith.constant 0 : index
    %95 = vector.load %arg10[%c0_52, %c2_53, %c0_54, %c0_55] : memref<3x6x2x16xf32, #tpu.memory_space<vmem>>, vector<3x1x2x16xf32>
    %96 = vector.shape_cast %95 : vector<3x1x2x16xf32> to vector<3x2x16xf32>
    %97 = vector.shape_cast %69 : vector<3x2x16xf32> to vector<3x1x2x16xf32>
    tpu.vector_store %arg10[%c0_52, %c2_53, %c0_54, %c0_55], %97 {strides = array<i32>} : memref<3x6x2x16xf32, #tpu.memory_space<vmem>>, vector<3x1x2x16xf32>,
    %c0_56 = arith.constant 0 : index
    %c3 = arith.constant 3 : index
    %c0_57 = arith.constant 0 : index
    %c0_58 = arith.constant 0 : index
    %98 = vector.load %arg10[%c0_56, %c3, %c0_57, %c0_58] : memref<3x6x2x16xf32, #tpu.memory_space<vmem>>, vector<3x1x2x16xf32>
    %99 = vector.shape_cast %98 : vector<3x1x2x16xf32> to vector<3x2x16xf32>
    %100 = vector.shape_cast %88 : vector<3x2x16xf32> to vector<3x1x2x16xf32>
    tpu.vector_store %arg10[%c0_56, %c3, %c0_57, %c0_58], %100 {strides = array<i32>} : memref<3x6x2x16xf32, #tpu.memory_space<vmem>>, vector<3x1x2x16xf32>,
    %c0_59 = arith.constant 0 : index
    %c4 = arith.constant 4 : index
    %c0_60 = arith.constant 0 : index
    %c0_61 = arith.constant 0 : index
    %101 = vector.load %arg10[%c0_59, %c4, %c0_60, %c0_61] : memref<3x6x2x16xf32, #tpu.memory_space<vmem>>, vector<3x1x2x16xf32>
    %102 = vector.shape_cast %101 : vector<3x1x2x16xf32> to vector<3x2x16xf32>
    %103 = vector.shape_cast %49 : vector<3x2x16xf32> to vector<3x1x2x16xf32>
    tpu.vector_store %arg10[%c0_59, %c4, %c0_60, %c0_61], %103 {strides = array<i32>} : memref<3x6x2x16xf32, #tpu.memory_space<vmem>>, vector<3x1x2x16xf32>,
    %c0_62 = arith.constant 0 : index
    %c5 = arith.constant 5 : index
    %c0_63 = arith.constant 0 : index
    %c0_64 = arith.constant 0 : index
    %104 = vector.load %arg10[%c0_62, %c5, %c0_63, %c0_64] : memref<3x6x2x16xf32, #tpu.memory_space<vmem>>, vector<3x1x2x16xf32>
    %105 = vector.shape_cast %104 : vector<3x1x2x16xf32> to vector<3x2x16xf32>
    %106 = vector.shape_cast %61 : vector<3x2x16xf32> to vector<3x1x2x16xf32>
    tpu.vector_store %arg10[%c0_62, %c5, %c0_63, %c0_64], %106 {strides = array<i32>} : memref<3x6x2x16xf32, #tpu.memory_space<vmem>>, vector<3x1x2x16xf32>,
    return
  }
  func.func @transform_0(%arg0: i32) -> (i32, i32, i32, i32) {
    %c0_i32 = arith.constant 0 : i32
    %c0_i32_0 = arith.constant 0 : i32
    %c0_i32_1 = arith.constant 0 : i32
    %c0_i32_2 = arith.constant 0 : i32
    return %arg0, %c0_i32, %c0_i32_0, %c0_i32_1 : i32, i32, i32, i32
  }
  func.func @transform_1(%arg0: i32) -> (i32, i32, i32) {
    %c0_i32 = arith.constant 0 : i32
    %c0_i32_0 = arith.constant 0 : i32
    %c0_i32_1 = arith.constant 0 : i32
    return %arg0, %c0_i32, %c0_i32_0 : i32, i32, i32
  }
  func.func @transform_2(%arg0: i32) -> (i32, i32, i32) {
    %c0_i32 = arith.constant 0 : i32
    %c0_i32_0 = arith.constant 0 : i32
    %c0_i32_1 = arith.constant 0 : i32
    return %arg0, %c0_i32, %c0_i32_0 : i32, i32, i32
  }
  func.func @transform_3(%arg0: i32) -> (i32, i32, i32) {
    %c0_i32 = arith.constant 0 : i32
    %c0_i32_0 = arith.constant 0 : i32
    %c0_i32_1 = arith.constant 0 : i32
    return %arg0, %c0_i32, %c0_i32_0 : i32, i32, i32
  }
  func.func @transform_4(%arg0: i32) -> (i32, i32, i32) {
    %c0_i32 = arith.constant 0 : i32
    %c0_i32_0 = arith.constant 0 : i32
    %c0_i32_1 = arith.constant 0 : i32
    return %arg0, %c0_i32, %c0_i32_0 : i32, i32, i32
  }
  func.func @transform_5(%arg0: i32) -> (i32, i32) {
    %c0_i32 = arith.constant 0 : i32
    %c0_i32_0 = arith.constant 0 : i32
    %c0_i32_1 = arith.constant 0 : i32
    return %c0_i32, %c0_i32_0 : i32, i32
  }
  func.func @transform_6(%arg0: i32) -> (i32, i32) {
    %c0_i32 = arith.constant 0 : i32
    %c0_i32_0 = arith.constant 0 : i32
    %c0_i32_1 = arith.constant 0 : i32
    return %c0_i32, %c0_i32_0 : i32, i32
  }
  func.func @transform_7(%arg0: i32) -> (i32, i32) {
    %c0_i32 = arith.constant 0 : i32
    %c0_i32_0 = arith.constant 0 : i32
    %c0_i32_1 = arith.constant 0 : i32
    return %c0_i32, %c0_i32_0 : i32, i32
  }
  func.func @transform_8(%arg0: i32) -> (i32, i32) {
    %c0_i32 = arith.constant 0 : i32
    %c0_i32_0 = arith.constant 0 : i32
    %c0_i32_1 = arith.constant 0 : i32
    return %c0_i32, %c0_i32_0 : i32, i32
  }
  func.func @transform_9(%arg0: i32) -> (i32, i32, i32, i32) {
    %c0_i32 = arith.constant 0 : i32
    %c0_i32_0 = arith.constant 0 : i32
    %c0_i32_1 = arith.constant 0 : i32
    %c0_i32_2 = arith.constant 0 : i32
    return %arg0, %c0_i32, %c0_i32_0, %c0_i32_1 : i32, i32, i32, i32
  }
}

</mosaic_0001>

<llo_original>
// kernel: tpu_custom_call.1
$region0: #{tpu_custom_call.1}
  #allocation0 [shape = 'u32[]', space=smem, size = 0x4, offset = 0x4, fixed_abs, tag = 'smem constant byte address 0x4 - core index']
  #allocation1 [shape = 'u32[72,128]{1,0:T(1,128)}', space=vmem, size = 0x9000, scoped, tag = 'internal scratch']
  #allocation2 [shape = 'f32[1,1]{1,0:T(1,128)S(6)}', space=smem, size = 0x200, scoped, tag = 'scoped memory for tpu_custom_call.1']
  %s0 = inlined_call_operand.hbm [shape: f32[6,2,8,32], index: 0, kind: input, shape index: {}]
  %s1 = inlined_call_operand.hbm [shape: f32[6,2,8], index: 1, kind: input, shape index: {}]
  %s2 = inlined_call_operand.hbm [shape: f32[6,8,16], index: 2, kind: input, shape index: {}]
  %s3 = inlined_call_operand.hbm [shape: f32[6,1,16], index: 3, kind: input, shape index: {}]
  %s4 = inlined_call_operand.hbm [shape: f32[6,1,16], index: 4, kind: input, shape index: {}]
  %s5 = inlined_call_operand.hbm [shape: f32[16,16], index: 5, kind: input, shape index: {}]
  %s6 = inlined_call_operand.vmem [shape: f32[1,16], index: 6, kind: input, shape index: {}]
  %s7 = inlined_call_operand.vmem [shape: f32[1,32], index: 7, kind: input, shape index: {}]
  %s8 = inlined_call_operand.<no memory space> [shape: f32[1,1], index: 8, kind: input, shape index: {}]
  %s9 = inlined_call_operand.hbm [shape: f32[6,6,2,16], index: 9, kind: output, shape index: {}]
  %s10 = sld [smem:[#allocation0]]
  $region93: #{tpu_custom_call.1} parent=0
    _
  %s12 = ssub.s32 1, %s10
  %s13 = scalar_select 0, %s12, %s10
  %14 = sst [smem:[#allocation2]] %s8
  $region1: #{tpu_custom_call.1} parent=0
    #allocation3 [shape = 'u8[49152]{0}', space=vmem, size = 0xc000, scoped, tag = 'input window, operand 0']
    #allocation4 [shape = 's32[2]{0}', space=sflag, size = 0x8, scoped, tag = 'scoped memory for tpu_custom_call.1']
    #allocation5 [shape = 's32[2]{0}', space=sflag, size = 0x8, scoped, tag = 'scoped memory for tpu_custom_call.1']
    #allocation6 [shape = 'u8[6144]{0}', space=vmem, size = 0x1800, scoped, tag = 'input window, operand 1']
    #allocation7 [shape = 's32[2]{0}', space=sflag, size = 0x8, scoped, tag = 'scoped memory for tpu_custom_call.1']
    #allocation8 [shape = 'u8[24576]{0}', space=vmem, size = 0x6000, scoped, tag = 'input window, operand 2']
    #allocation9 [shape = 'u8[3072]{0}', space=vmem, size = 0xc00, scoped, tag = 'input window, operand 3']
    #allocation10 [shape = 's32[2]{0}', space=sflag, size = 0x8, scoped, tag = 'scoped memory for tpu_custom_call.1']
    #allocation11 [shape = 'u8[3072]{0}', space=vmem, size = 0xc00, scoped, tag = 'input window, operand 4']
    #allocation12 [shape = 'u8[8192]{0}', space=vmem, size = 0x2000, scoped, tag = 'input window, operand 5, single buffered']
    #allocation13 [shape = 's32[1]{0}', space=sflag, size = 0x4, scoped, tag = 'scoped memory for tpu_custom_call.1']
    #allocation14 [shape = 'u8[36864]{0}', space=vmem, size = 0x9000, scoped, tag = 'output window, operand 0']
    %15 = vsyncpa [#allocation4], 0
    %s16 = scalar_lea.sflag [#allocation4], 1
    %17 = vsyncpa %s16, 0
    %18 = vsyncpa [#allocation7], 0
    %s19 = scalar_lea.sflag [#allocation7], 1
    %20 = vsyncpa %s19, 0
    %21 = vsyncpa [#allocation10], 0
    %s22 = scalar_lea.sflag [#allocation10], 1
    %23 = vsyncpa %s22, 0
    %24 = vsyncpa [#allocation13], 0
    %25 = vsyncpa [#allocation5], 0
    %s26 = scalar_lea.sflag [#allocation5], 1
    %27 = vsyncpa %s26, 0
    loop: start=0, step=1, limit=4
    $region2: #{tpu_custom_call.1} parent=1 // loop_pre_header
      _
    $region3: #{tpu_custom_call.1} parent=1 // loop_header
      %s29 = sphi 0, %s33
      %p30 = scmp.ge.s32.totalorder %s29, 4
      %s39 = sphi 0, %s41
      %s42 = sphi 0, %s39
      %s43 = sphi 0, %s42
      %s59 = sphi 0, %s43
      %s65 = sphi 0, %s67
      %s68 = sphi 0, %s65
      %s69 = sphi 0, %s68
      %s85 = sphi 0, %s69
      %s91 = sphi 0, %s93
      %s94 = sphi 0, %s91
      %s95 = sphi 0, %s94
      %s111 = sphi 0, %s95
      %s117 = sphi 0, %s119
      %s120 = sphi 0, %s117
      %s121 = sphi 0, %s120
      %s137 = sphi 0, %s121
      %s143 = sphi 0, %s145
      %s146 = sphi 0, %s143
      %s147 = sphi 0, %s146
      %s163 = sphi 0, %s147
      %s167 = sphi 0, %s167
      %s169 = sphi 0, %s167
      %s170 = sphi 0, %s169
      %s184 = sphi 0, %s170
      %s188 = sphi 0, %s188
      %s190 = sphi 0, %s188
      %s191 = sphi 0, %s190
      %s205 = sphi 0, %s191
      %s209 = sphi 0, %s209
      %s211 = sphi 0, %s209
      %s212 = sphi 0, %s211
      %s226 = sphi 0, %s212
      %s230 = sphi 0, %s230
      %s232 = sphi 0, %s230
      %s233 = sphi 0, %s232
      %s247 = sphi 0, %s233
      %s253 = sphi 0, %s255
      %s256 = sphi 0, %s253
      %s257 = sphi 0, %s256
      %s273 = sphi 0, %s257
    $region4: #{tpu_custom_call.1} parent=1 // loop_header_branch
      %32 = sbr.rel (%p30) target = $region8
    $region5: #{tpu_custom_call.1} parent=1 // loop_body
      %s34 = ssub.s32 %s29, 1
      %s35 = ssub.s32 %s29, 2
      %s36 = sadd.s32 %s29, 1
      %s37 = ssub.s32 %s29, %s36
      %p38 = scmp.eq.s32.totalorder %s37, 0
      %s40 = sadd.s32 %s39, 1
      %s41 = scalar_select %p38, %s39, %s40
      %p44 = pneg %p38
      %p45 = scmp.eq.s32.totalorder %s29, 1
      %p46 = por %p44, %p45
      %p47 = scmp.ne.s32.totalorder %s39, %s42
      %p48 = scmp.eq.s32.totalorder %s29, 0
      %p49 = por %p47, %p48
      %p50 = scmp.ne.s32.totalorder %s39, %s42
      %p51 = scmp.eq.s32.totalorder %s34, 1
      %p52 = por %p50, %p51
      %p53 = scmp.ne.s32.totalorder %s42, %s43
      %p54 = scmp.eq.s32.totalorder %s34, 0
      %p55 = por %p53, %p54
      %p56 = scmp.ne.s32.totalorder %s42, %s43
      %p57 = scmp.eq.s32.totalorder %s35, 1
      %p58 = por %p56, %p57
      %p60 = scmp.ne.s32.totalorder %s43, %s59
      %p61 = scmp.eq.s32.totalorder %s35, 0
      %p62 = por %p60, %p61
      %s63 = ssub.s32 %s29, %s36
      %p64 = scmp.eq.s32.totalorder %s63, 0
      %s66 = sadd.s32 %s65, 1
      %s67 = scalar_select %p64, %s65, %s66
      %p70 = pneg %p64
      %p71 = scmp.eq.s32.totalorder %s29, 1
      %p72 = por %p70, %p71
      %p73 = scmp.ne.s32.totalorder %s65, %s68
      %p74 = scmp.eq.s32.totalorder %s29, 0
      %p75 = por %p73, %p74
      %p76 = scmp.ne.s32.totalorder %s65, %s68
      %p77 = scmp.eq.s32.totalorder %s34, 1
      %p78 = por %p76, %p77
      %p79 = scmp.ne.s32.totalorder %s68, %s69
      %p80 = scmp.eq.s32.totalorder %s34, 0
      %p81 = por %p79, %p80
      %p82 = scmp.ne.s32.totalorder %s68, %s69
      %p83 = scmp.eq.s32.totalorder %s35, 1
      %p84 = por %p82, %p83
      %p86 = scmp.ne.s32.totalorder %s69, %s85
      %p87 = scmp.eq.s32.totalorder %s35, 0
      %p88 = por %p86, %p87
      %s89 = ssub.s32 %s29, %s36
      %p90 = scmp.eq.s32.totalorder %s89, 0
      %s92 = sadd.s32 %s91, 1
      %s93 = scalar_select %p90, %s91, %s92
      %p96 = pneg %p90
      %p97 = scmp.eq.s32.totalorder %s29, 1
      %p98 = por %p96, %p97
      %p99 = scmp.ne.s32.totalorder %s91, %s94
      %p100 = scmp.eq.s32.totalorder %s29, 0
      %p101 = por %p99, %p100
      %p102 = scmp.ne.s32.totalorder %s91, %s94
      %p103 = scmp.eq.s32.totalorder %s34, 1
      %p104 = por %p102, %p103
      %p105 = scmp.ne.s32.totalorder %s94, %s95
      %p106 = scmp.eq.s32.totalorder %s34, 0
      %p107 = por %p105, %p106
      %p108 = scmp.ne.s32.totalorder %s94, %s95
      %p109 = scmp.eq.s32.totalorder %s35, 1
      %p110 = por %p108, %p109
      %p112 = scmp.ne.s32.totalorder %s95, %s111
      %p113 = scmp.eq.s32.totalorder %s35, 0
      %p114 = por %p112, %p113
      %s115 = ssub.s32 %s29, %s36
      %p116 = scmp.eq.s32.totalorder %s115, 0
      %s118 = sadd.s32 %s117, 1
      %s119 = scalar_select %p116, %s117, %s118
      %p122 = pneg %p116
      %p123 = scmp.eq.s32.totalorder %s29, 1
      %p124 = por %p122, %p123
      %p125 = scmp.ne.s32.totalorder %s117, %s120
      %p126 = scmp.eq.s32.totalorder %s29, 0
      %p127 = por %p125, %p126
      %p128 = scmp.ne.s32.totalorder %s117, %s120
      %p129 = scmp.eq.s32.totalorder %s34, 1
      %p130 = por %p128, %p129
      %p131 = scmp.ne.s32.totalorder %s120, %s121
      %p132 = scmp.eq.s32.totalorder %s34, 0
      %p133 = por %p131, %p132
      %p134 = scmp.ne.s32.totalorder %s120, %s121
      %p135 = scmp.eq.s32.totalorder %s35, 1
      %p136 = por %p134, %p135
      %p138 = scmp.ne.s32.totalorder %s121, %s137
      %p139 = scmp.eq.s32.totalorder %s35, 0
      %p140 = por %p138, %p139
      %s141 = ssub.s32 %s29, %s36
      %p142 = scmp.eq.s32.totalorder %s141, 0
      %s144 = sadd.s32 %s143, 1
      %s145 = scalar_select %p142, %s143, %s144
      %p148 = pneg %p142
      %p149 = scmp.eq.s32.totalorder %s29, 1
      %p150 = por %p148, %p149
      %p151 = scmp.ne.s32.totalorder %s143, %s146
      %p152 = scmp.eq.s32.totalorder %s29, 0
      %p153 = por %p151, %p152
      %p154 = scmp.ne.s32.totalorder %s143, %s146
      %p155 = scmp.eq.s32.totalorder %s34, 1
      %p156 = por %p154, %p155
      %p157 = scmp.ne.s32.totalorder %s146, %s147
      %p158 = scmp.eq.s32.totalorder %s34, 0
      %p159 = por %p157, %p158
      %p160 = scmp.ne.s32.totalorder %s146, %s147
      %p161 = scmp.eq.s32.totalorder %s35, 1
      %p162 = por %p160, %p161
      %p164 = scmp.ne.s32.totalorder %s147, %s163
      %p165 = scmp.eq.s32.totalorder %s35, 0
      %p166 = por %p164, %p165
      %s168 = sadd.s32 %s167, 1
      %p171 = scmp.eq.s32.totalorder %s29, 1
      %p172 = scmp.ne.s32.totalorder %s167, %s169
      %p173 = scmp.eq.s32.totalorder %s29, 0
      %p174 = por %p172, %p173
      %p175 = scmp.ne.s32.totalorder %s167, %s169
      %p176 = scmp.eq.s32.totalorder %s34, 1
      %p177 = por %p175, %p176
      %p178 = scmp.ne.s32.totalorder %s169, %s170
      %p179 = scmp.eq.s32.totalorder %s34, 0
      %p180 = por %p178, %p179
      %p181 = scmp.ne.s32.totalorder %s169, %s170
      %p182 = scmp.eq.s32.totalorder %s35, 1
      %p183 = por %p181, %p182
      %p185 = scmp.ne.s32.totalorder %s170, %s184
      %p186 = scmp.eq.s32.totalorder %s35, 0
      %p187 = por %p185, %p186
      %s189 = sadd.s32 %s188, 1
      %p192 = scmp.eq.s32.totalorder %s29, 1
      %p193 = scmp.ne.s32.totalorder %s188, %s190
      %p194 = scmp.eq.s32.totalorder %s29, 0
      %p195 = por %p193, %p194
      %p196 = scmp.ne.s32.totalorder %s188, %s190
      %p197 = scmp.eq.s32.totalorder %s34, 1
      %p198 = por %p196, %p197
      %p199 = scmp.ne.s32.totalorder %s190, %s191
      %p200 = scmp.eq.s32.totalorder %s34, 0
      %p201 = por %p199, %p200
      %p202 = scmp.ne.s32.totalorder %s190, %s191
      %p203 = scmp.eq.s32.totalorder %s35, 1
      %p204 = por %p202, %p203
      %p206 = scmp.ne.s32.totalorder %s191, %s205
      %p207 = scmp.eq.s32.totalorder %s35, 0
      %p208 = por %p206, %p207
      %s210 = sadd.s32 %s209, 1
      %p213 = scmp.eq.s32.totalorder %s29, 1
      %p214 = scmp.ne.s32.totalorder %s209, %s211
      %p215 = scmp.eq.s32.totalorder %s29, 0
      %p216 = por %p214, %p215
      %p217 = scmp.ne.s32.totalorder %s209, %s211
      %p218 = scmp.eq.s32.totalorder %s34, 1
      %p219 = por %p217, %p218
      %p220 = scmp.ne.s32.totalorder %s211, %s212
      %p221 = scmp.eq.s32.totalorder %s34, 0
      %p222 = por %p220, %p221
      %p223 = scmp.ne.s32.totalorder %s211, %s212
      %p224 = scmp.eq.s32.totalorder %s35, 1
      %p225 = por %p223, %p224
      %p227 = scmp.ne.s32.totalorder %s212, %s226
      %p228 = scmp.eq.s32.totalorder %s35, 0
      %p229 = por %p227, %p228
      %s231 = sadd.s32 %s230, 1
      %p234 = scmp.eq.s32.totalorder %s29, 1
      %p235 = scmp.ne.s32.totalorder %s230, %s232
      %p236 = scmp.eq.s32.totalorder %s29, 0
      %p237 = por %p235, %p236
      %p238 = scmp.ne.s32.totalorder %s230, %s232
      %p239 = scmp.eq.s32.totalorder %s34, 1
      %p240 = por %p238, %p239
      %p241 = scmp.ne.s32.totalorder %s232, %s233
      %p242 = scmp.eq.s32.totalorder %s34, 0
      %p243 = por %p241, %p242
      %p244 = scmp.ne.s32.totalorder %s232, %s233
      %p245 = scmp.eq.s32.totalorder %s35, 1
      %p246 = por %p244, %p245
      %p248 = scmp.ne.s32.totalorder %s233, %s247
      %p249 = scmp.eq.s32.totalorder %s35, 0
      %p250 = por %p248, %p249
      %s251 = ssub.s32 %s29, %s36
      %p252 = scmp.eq.s32.totalorder %s251, 0
      %s254 = sadd.s32 %s253, 1
      %s255 = scalar_select %p252, %s253, %s254
      %p258 = pneg %p252
      %p259 = scmp.eq.s32.totalorder %s29, 1
      %p260 = por %p258, %p259
      %p261 = scmp.ne.s32.totalorder %s253, %s256
      %p262 = scmp.eq.s32.totalorder %s29, 0
      %p263 = por %p261, %p262
      %p264 = scmp.ne.s32.totalorder %s253, %s256
      %p265 = scmp.eq.s32.totalorder %s34, 1
      %p266 = por %p264, %p265
      %p267 = scmp.ne.s32.totalorder %s256, %s257
      %p268 = scmp.eq.s32.totalorder %s34, 0
      %p269 = por %p267, %p268
      %p270 = scmp.ne.s32.totalorder %s256, %s257
      %p271 = scmp.eq.s32.totalorder %s35, 1
      %p272 = por %p270, %p271
      %p274 = scmp.ne.s32.totalorder %s257, %s273
      %p275 = scmp.eq.s32.totalorder %s35, 0
      %p276 = por %p274, %p275
      %p277 = scmp.le.s32.totalorder 1, %s29
      %p278 = scmp.lt.s32.totalorder %s29, 3
      %p279 = pnand %p277, %p278
      %p280 = pneg %p279
      // Predicated region
      $region9: #{tpu_custom_call.1} parent=5 // pred_check
        _
      $region10: #{tpu_custom_call.1} parent=5 // pred_check_branch
        %282 = sbr.rel (%p279) target = $region12
      $region11: #{tpu_custom_call.1} parent=5 // pred_region
        %s283 = ssub.s32 %s29, 1
        // Predicated region
        $region13: #{tpu_custom_call.1} parent=11 // pred_check
          %p284 = pneg %p180
        $region14: #{tpu_custom_call.1} parent=11 // pred_check_branch
          %286 = sbr.rel (%p284) target = $region16
        $region15: #{tpu_custom_call.1} parent=11 // pred_region
          %288 = vsyncadd [#allocation13], 0
          %s289 = sshll.u32 %s5, 4
          %s290 = int_to_ptr.hbm [resolvable:$true] %s289
          %s291 = sshll.u32 [#allocation12], 4
          %s292 = int_to_ptr.vmem [resolvable:$true] %s291
          %297 = dma.hbm_to_vmem [thread:$0]  %s290, 256, %s292, [#allocation13], 128, 128, 8
        $region16: #{tpu_custom_call.1} parent=11 // pred_fallthru
          _
        // Predicated region
        $region17: #{tpu_custom_call.1} parent=11 // pred_check
          %p298 = pneg %p201
        $region18: #{tpu_custom_call.1} parent=11 // pred_check_branch
          %300 = sbr.rel (%p298) target = $region20
        $region19: #{tpu_custom_call.1} parent=11 // pred_region
          _
        $region20: #{tpu_custom_call.1} parent=11 // pred_fallthru
          _
        // Predicated region
        $region21: #{tpu_custom_call.1} parent=11 // pred_check
          %p301 = pneg %p222
        $region22: #{tpu_custom_call.1} parent=11 // pred_check_branch
          %303 = sbr.rel (%p301) target = $region24
        $region23: #{tpu_custom_call.1} parent=11 // pred_region
          _
        $region24: #{tpu_custom_call.1} parent=11 // pred_fallthru
          _
        // Predicated region
        $region25: #{tpu_custom_call.1} parent=11 // pred_check
          %p304 = pneg %p243
        $region26: #{tpu_custom_call.1} parent=11 // pred_check_branch
          %306 = sbr.rel (%p304) target = $region28
        $region27: #{tpu_custom_call.1} parent=11 // pred_region
          _
        $region28: #{tpu_custom_call.1} parent=11 // pred_fallthru
          _
      $region12: #{tpu_custom_call.1} parent=5 // pred_fallthru
        _
      %p307 = scmp.lt.s32.totalorder %s29, 2
      // Predicated region
      $region29: #{tpu_custom_call.1} parent=5 // pred_check
        %p308 = pneg %p307
      $region30: #{tpu_custom_call.1} parent=5 // pred_check_branch
        %310 = sbr.rel (%p308) target = $region32
      $region31: #{tpu_custom_call.1} parent=5 // pred_region
        // Predicated region
        $region33: #{tpu_custom_call.1} parent=31 // pred_check
          %p311 = pneg %p49
        $region34: #{tpu_custom_call.1} parent=31 // pred_check_branch
          %313 = sbr.rel (%p311) target = $region36
        $region35: #{tpu_custom_call.1} parent=31 // pred_region
          %s314 = sand.u32 %s39, 1
          %s315 = scalar_lea.sflag [#allocation4], %s314
          %s316 = sand.u32 %s39, 1
          %s317 = smul.addr %s316, 48
          %s318 = scalar_lea.vmem [#allocation3], %s317
          %s319 = smul.u32 3, %s29
          %321 = vsyncadd %s315, 0
          %s322 = smul.addr %s319, 2
          %s323 = smul.addr %s322, 8
          %s324 = scalar_lea.hbm %s0, %s323
          %s325 = sshll.u32 %s324, 4
          %s326 = int_to_ptr.hbm [resolvable:$true] %s325
          %s327 = sshll.u32 %s318, 4
          %s328 = int_to_ptr.vmem [resolvable:$true] %s327
          %333 = dma.hbm_to_vmem [thread:$0]  %s326, 768, %s328, %s315, 128, 128, 8
        $region36: #{tpu_custom_call.1} parent=31 // pred_fallthru
          _
        // Predicated region
        $region37: #{tpu_custom_call.1} parent=31 // pred_check
          %p334 = pneg %p75
        $region38: #{tpu_custom_call.1} parent=31 // pred_check_branch
          %336 = sbr.rel (%p334) target = $region40
        $region39: #{tpu_custom_call.1} parent=31 // pred_region
          %s337 = sand.u32 %s29, 1
          %s338 = scalar_lea.sflag [#allocation7], %s337
          %s339 = sand.u32 %s65, 1
          %s340 = smul.addr %s339, 6
          %s341 = scalar_lea.vmem [#allocation6], %s340
          %s342 = smul.u32 3, %s29
          %344 = vsyncadd %s338, 0
          %s345 = smul.addr %s342, 2
          %s346 = scalar_lea.hbm %s1, %s345
          %s347 = sshll.u32 %s346, 4
          %s348 = int_to_ptr.hbm [resolvable:$true] %s347
          %s349 = sshll.u32 %s341, 4
          %s350 = int_to_ptr.vmem [resolvable:$true] %s349
          %355 = dma.hbm_to_vmem [thread:$0]  %s348, 96, %s350, %s338, 32, 32, 2
        $region40: #{tpu_custom_call.1} parent=31 // pred_fallthru
          _
        // Predicated region
        $region41: #{tpu_custom_call.1} parent=31 // pred_check
          %p356 = pneg %p101
        $region42: #{tpu_custom_call.1} parent=31 // pred_check_branch
          %358 = sbr.rel (%p356) target = $region44
        $region43: #{tpu_custom_call.1} parent=31 // pred_region
          %s359 = sand.u32 %s29, 1
          %s360 = scalar_lea.sflag [#allocation7], %s359
          %s361 = sand.u32 %s91, 1
          %s362 = smul.addr %s361, 24
          %s363 = scalar_lea.vmem [#allocation8], %s362
          %s364 = smul.u32 3, %s29
          %366 = vsyncadd %s360, 0
          %s367 = smul.addr %s364, 8
          %s368 = scalar_lea.hbm %s2, %s367
          %s369 = sshll.u32 %s368, 4
          %s370 = int_to_ptr.hbm [resolvable:$true] %s369
          %s371 = sshll.u32 %s363, 4
          %s372 = int_to_ptr.vmem [resolvable:$true] %s371
          %377 = dma.hbm_to_vmem [thread:$0]  %s370, 384, %s372, %s360, 128, 128, 8
        $region44: #{tpu_custom_call.1} parent=31 // pred_fallthru
          _
        // Predicated region
        $region45: #{tpu_custom_call.1} parent=31 // pred_check
          %p378 = pneg %p127
        $region46: #{tpu_custom_call.1} parent=31 // pred_check_branch
          %380 = sbr.rel (%p378) target = $region48
        $region47: #{tpu_custom_call.1} parent=31 // pred_region
          %s381 = sand.u32 %s29, 1
          %s382 = scalar_lea.sflag [#allocation10], %s381
          %s383 = sand.u32 %s117, 1
          %s384 = smul.addr %s383, 3
          %s385 = scalar_lea.vmem [#allocation9], %s384
          %s386 = smul.u32 3, %s29
          %388 = vsyncadd %s382, 0
          %s389 = scalar_lea.hbm %s3, %s386
          %s390 = sshll.u32 %s389, 4
          %s391 = int_to_ptr.hbm [resolvable:$true] %s390
          %s392 = sshll.u32 %s385, 4
          %s393 = int_to_ptr.vmem [resolvable:$true] %s392
          %398 = dma.hbm_to_vmem [thread:$0]  %s391, 48, %s393, %s382, 16, 16, 1
        $region48: #{tpu_custom_call.1} parent=31 // pred_fallthru
          _
        // Predicated region
        $region49: #{tpu_custom_call.1} parent=31 // pred_check
          %p399 = pneg %p153
        $region50: #{tpu_custom_call.1} parent=31 // pred_check_branch
          %401 = sbr.rel (%p399) target = $region52
        $region51: #{tpu_custom_call.1} parent=31 // pred_region
          %s402 = sand.u32 %s29, 1
          %s403 = scalar_lea.sflag [#allocation10], %s402
          %s404 = sand.u32 %s143, 1
          %s405 = smul.addr %s404, 3
          %s406 = scalar_lea.vmem [#allocation11], %s405
          %s407 = smul.u32 3, %s29
          %409 = vsyncadd %s403, 0
          %s410 = scalar_lea.hbm %s4, %s407
          %s411 = sshll.u32 %s410, 4
          %s412 = int_to_ptr.hbm [resolvable:$true] %s411
          %s413 = sshll.u32 %s406, 4
          %s414 = int_to_ptr.vmem [resolvable:$true] %s413
          %419 = dma.hbm_to_vmem [thread:$0]  %s412, 48, %s414, %s403, 16, 16, 1
        $region52: #{tpu_custom_call.1} parent=31 // pred_fallthru
          _
      $region32: #{tpu_custom_call.1} parent=5 // pred_fallthru
        _
      %p420 = scmp.le.s32.totalorder 1, %s29
      %p421 = scmp.lt.s32.totalorder %s29, 3
      %p422 = pnand %p420, %p421
      %p423 = pneg %p422
      // Predicated region
      $region53: #{tpu_custom_call.1} parent=5 // pred_check
        _
      $region54: #{tpu_custom_call.1} parent=5 // pred_check_branch
        %425 = sbr.rel (%p422) target = $region56
      $region55: #{tpu_custom_call.1} parent=5 // pred_region
        %s426 = ssub.s32 %s29, 1
        %s427 = sand.u32 %s42, 1
        %s428 = scalar_lea.sflag [#allocation4], %s427
        %s429 = sand.u32 %s42, 1
        %s430 = smul.addr %s429, 48
        %s431 = scalar_lea.vmem [#allocation3], %s430
        // Predicated region
        $region57: #{tpu_custom_call.1} parent=55 // pred_check
          %p432 = pneg %p55
        $region58: #{tpu_custom_call.1} parent=55 // pred_check_branch
          %434 = sbr.rel (%p432) target = $region60
        $region59: #{tpu_custom_call.1} parent=55 // pred_region
          %436 = dma.done %s428, 768
        $region60: #{tpu_custom_call.1} parent=55 // pred_fallthru
          _
        %s437 = sand.u32 %s34, 1
        %s438 = scalar_lea.sflag [#allocation7], %s437
        %s439 = sand.u32 %s68, 1
        %s440 = smul.addr %s439, 6
        %s441 = scalar_lea.vmem [#allocation6], %s440
        // Predicated region
        $region61: #{tpu_custom_call.1} parent=55 // pred_check
          %p442 = pneg %p81
        $region62: #{tpu_custom_call.1} parent=55 // pred_check_branch
          %444 = sbr.rel (%p442) target = $region64
        $region63: #{tpu_custom_call.1} parent=55 // pred_region
          %446 = dma.done %s438, 96
        $region64: #{tpu_custom_call.1} parent=55 // pred_fallthru
          _
        %s447 = sand.u32 %s34, 1
        %s448 = scalar_lea.sflag [#allocation7], %s447
        %s449 = sand.u32 %s94, 1
        %s450 = smul.addr %s449, 24
        %s451 = scalar_lea.vmem [#allocation8], %s450
        // Predicated region
        $region65: #{tpu_custom_call.1} parent=55 // pred_check
          %p452 = pneg %p107
        $region66: #{tpu_custom_call.1} parent=55 // pred_check_branch
          %454 = sbr.rel (%p452) target = $region68
        $region67: #{tpu_custom_call.1} parent=55 // pred_region
          %456 = dma.done %s448, 384
        $region68: #{tpu_custom_call.1} parent=55 // pred_fallthru
          _
        %s457 = sand.u32 %s34, 1
        %s458 = scalar_lea.sflag [#allocation10], %s457
        %s459 = sand.u32 %s120, 1
        %s460 = smul.addr %s459, 3
        %s461 = scalar_lea.vmem [#allocation9], %s460
        // Predicated region
        $region69: #{tpu_custom_call.1} parent=55 // pred_check
          %p462 = pneg %p133
        $region70: #{tpu_custom_call.1} parent=55 // pred_check_branch
          %464 = sbr.rel (%p462) target = $region72
        $region71: #{tpu_custom_call.1} parent=55 // pred_region
          %466 = dma.done %s458, 48
        $region72: #{tpu_custom_call.1} parent=55 // pred_fallthru
          _
        %s467 = sand.u32 %s34, 1
        %s468 = scalar_lea.sflag [#allocation10], %s467
        %s469 = sand.u32 %s146, 1
        %s470 = smul.addr %s469, 3
        %s471 = scalar_lea.vmem [#allocation11], %s470
        // Predicated region
        $region73: #{tpu_custom_call.1} parent=55 // pred_check
          %p472 = pneg %p159
        $region74: #{tpu_custom_call.1} parent=55 // pred_check_branch
          %474 = sbr.rel (%p472) target = $region76
        $region75: #{tpu_custom_call.1} parent=55 // pred_region
          %476 = dma.done %s468, 48
        $region76: #{tpu_custom_call.1} parent=55 // pred_fallthru
          _
        // Predicated region
        $region77: #{tpu_custom_call.1} parent=55 // pred_check
          %p477 = pneg %p180
        $region78: #{tpu_custom_call.1} parent=55 // pred_check_branch
          %479 = sbr.rel (%p477) target = $region80
        $region79: #{tpu_custom_call.1} parent=55 // pred_region
          %481 = dma.done [#allocation13], 256
        $region80: #{tpu_custom_call.1} parent=55 // pred_fallthru
          _
        %s482 = sand.u32 %s42, 1
        %s483 = scalar_lea.sflag [#allocation4], %s482
        %s484 = sand.u32 %s42, 1
        %s485 = smul.addr %s484, 48
        %s486 = scalar_lea.vmem [#allocation3], %s485
        %p487 = pneg %p55
        %p488 = pneg %p52
        %s489 = sand.u32 %s34, 1
        %s490 = scalar_lea.sflag [#allocation7], %s489
        %s491 = sand.u32 %s68, 1
        %s492 = smul.addr %s491, 6
        %s493 = scalar_lea.vmem [#allocation6], %s492
        %p494 = pneg %p81
        %p495 = pneg %p78
        %s496 = sand.u32 %s34, 1
        %s497 = scalar_lea.sflag [#allocation7], %s496
        %s498 = sand.u32 %s94, 1
        %s499 = smul.addr %s498, 24
        %s500 = scalar_lea.vmem [#allocation8], %s499
        %p501 = pneg %p107
        %p502 = pneg %p104
        %s503 = sand.u32 %s34, 1
        %s504 = scalar_lea.sflag [#allocation10], %s503
        %s505 = sand.u32 %s120, 1
        %s506 = smul.addr %s505, 3
        %s507 = scalar_lea.vmem [#allocation9], %s506
        %p508 = pneg %p133
        %p509 = pneg %p130
        %s510 = sand.u32 %s34, 1
        %s511 = scalar_lea.sflag [#allocation10], %s510
        %s512 = sand.u32 %s146, 1
        %s513 = smul.addr %s512, 3
        %s514 = scalar_lea.vmem [#allocation11], %s513
        %p515 = pneg %p159
        %p516 = pneg %p156
        %p517 = pneg %p180
        %p518 = pneg %p177
        %p519 = pneg %p201
        %p520 = pneg %p198
        %p521 = pneg %p222
        %p522 = pneg %p219
        %p523 = pneg %p243
        %p524 = pneg %p240
        %p525 = pneg %p269
        %p526 = pneg %p266
        %s527 = sand.u32 %s256, 1
        %s528 = scalar_lea.sflag [#allocation5], %s527
        %s529 = sand.u32 %s256, 1
        %s530 = smul.addr %s529, 36
        %s531 = scalar_lea.vmem [#allocation14], %s530
        %s532 = smul.u32 3, %s34
        %s533 = smul.u32 3, %s34
        %s534 = smul.u32 3, %s34
        %s535 = smul.u32 3, %s34
        %s536 = smul.u32 3, %s34
        %s537 = smul.u32 3, %s34
        %v538 = vld [vmem:[%s441] sm:$0x3]
        %v539 = vld [vmem:[%s441 + $0x2] sm:$0x3]
        %v540 = vld [vmem:[%s441 + $0x4] sm:$0x3]
        %v541 = vld [vmem:[%s451] sm:$0xff]
        %v542 = vld [vmem:[%s451 + $0x8] sm:$0xff]
        %v543 = vld [vmem:[%s451 + $0x10] sm:$0xff]
        %v544 = vld [vmem:[%s461] sm:$0x1]
        %v545 = vld [vmem:[%s461 + $0x1] sm:$0x1]
        %v546 = vld [vmem:[%s461 + $0x2] sm:$0x1]
        %v547 = vld [vmem:[%s471] sm:$0x1]
        %v548 = vld [vmem:[%s471 + $0x1] sm:$0x1]
        %v549 = vld [vmem:[%s471 + $0x2] sm:$0x1]
        %v550 = vld [vmem:[#allocation12] sm:$0xff]
        %v551 = vld [vmem:[#allocation12 + $0x8] sm:$0xff]
        %v552 = vld [vmem:[%s6] sm:$0x1]
        %v553 = vld [vmem:[%s7] sm:$0x1]
        %s554 = sld [smem:[#allocation2]]
        %v555 = vld [vmem:[%s431] sm:$0xff]
        %v556 = vld [vmem:[%s431 + $0x8] sm:$0xff]
        %v558 = vperm.slane %v553, 0
        %v560 = vmul.f32 %v555, %v558
        %v561 = vmul.f32 %v556, %v558
        %vm562 = vcmask 261120
        %v563 = vsel %vm562, %v560, 0.0
        %564 = vadd.xlane.f32.xlu0 %v563
        %v565 = vpop.xlane.xlu0 %564
        %v566 = vsel %vm562, %v561, 0.0
        %567 = vadd.xlane.f32.xlu0 %v566
        %v568 = vpop.xlane.xlu0 %567
        %v569 = vstv %s554
        %v570 = vadd.f32 %v565, %v569
        %v571 = vadd.f32 %v568, %v569
        %s572 = scalar_lea.vmem %s431, 16 [#allocation3]
        %v573 = vld [vmem:[%s572] sm:$0xff]
        %v574 = vld [vmem:[%s572 + $0x8] sm:$0xff]
        %v575 = vmul.f32 %v573, %v558
        %v576 = vmul.f32 %v574, %v558
        %v577 = vsel %vm562, %v575, 0.0
        %578 = vadd.xlane.f32.xlu0 %v577
        %v579 = vpop.xlane.xlu0 %578
        %v580 = vsel %vm562, %v576, 0.0
        %581 = vadd.xlane.f32.xlu0 %v580
        %v582 = vpop.xlane.xlu0 %581
        %v583 = vadd.f32 %v579, %v569
        %v584 = vadd.f32 %v582, %v569
        %s585 = scalar_lea.vmem %s431, 32 [#allocation3]
        %v586 = vld [vmem:[%s585] sm:$0xff]
        %v587 = vld [vmem:[%s585 + $0x8] sm:$0xff]
        %v588 = vmul.f32 %v586, %v558
        %v589 = vmul.f32 %v587, %v558
        %v590 = vsel %vm562, %v588, 0.0
        %591 = vadd.xlane.f32.xlu0 %v590
        %v592 = vpop.xlane.xlu0 %591
        %v593 = vsel %vm562, %v589, 0.0
        %594 = vadd.xlane.f32.xlu0 %v593
        %v595 = vpop.xlane.xlu0 %594
        %v596 = vadd.f32 %v592, %v569
        %v597 = vadd.f32 %v595, %v569
        %v598 = vmin.f32 %v570, 0.0
        %v599 = vmin.f32 %v571, 0.0
        %v600 = vmin.f32 %v583, 0.0
        %v601 = vmin.f32 %v584, 0.0
        %v602 = vmin.f32 %v596, 0.0
        %v603 = vmin.f32 %v597, 0.0
        %v604 = vand.u32 2147483647, %v570
        %v605 = vand.u32 2147483647, %v571
        %v606 = vand.u32 2147483647, %v583
        %v607 = vand.u32 2147483647, %v584
        %v608 = vand.u32 2147483647, %v596
        %v609 = vand.u32 2147483647, %v597
        %v610 = vsub.f32 0.0, %v604
        %v611 = vsub.f32 0.0, %v605
        %v612 = vsub.f32 0.0, %v606
        %v613 = vsub.f32 0.0, %v607
        %v614 = vsub.f32 0.0, %v608
        %v615 = vsub.f32 0.0, %v609
        %v616 = vmul.f32 %v610, 1.442695
        %v617 = vpow.pop %v616
        %v618 = vmul.f32 %v611, 1.442695
        %v619 = vpow.pop %v618
        %v620 = vmul.f32 %v612, 1.442695
        %v621 = vpow.pop %v620
        %v622 = vmul.f32 %v613, 1.442695
        %v623 = vpow.pop %v622
        %v624 = vmul.f32 %v614, 1.442695
        %v625 = vpow.pop %v624
        %v626 = vmul.f32 %v615, 1.442695
        %v627 = vpow.pop %v626
        %v628 = vadd.f32 %v617, 1.0
        %v629 = vadd.f32 %v619, 1.0
        %v630 = vadd.f32 %v621, 1.0
        %v631 = vadd.f32 %v623, 1.0
        %v632 = vadd.f32 %v625, 1.0
        %v633 = vadd.f32 %v627, 1.0
        %v634 = vlog2.pop %v628
        %v635 = vmul.f32 %v634, 0.6931472
        %v636 = vlog2.pop %v629
        %v637 = vmul.f32 %v636, 0.6931472
        %v638 = vlog2.pop %v630
        %v639 = vmul.f32 %v638, 0.6931472
        %v640 = vlog2.pop %v631
        %v641 = vmul.f32 %v640, 0.6931472
        %v642 = vlog2.pop %v632
        %v643 = vmul.f32 %v642, 0.6931472
        %v644 = vlog2.pop %v633
        %v645 = vmul.f32 %v644, 0.6931472
        %v646 = vsub.f32 %v598, %v635
        %v647 = vsub.f32 %v599, %v637
        %v648 = vsub.f32 %v600, %v639
        %v649 = vsub.f32 %v601, %v641
        %v650 = vsub.f32 %v602, %v643
        %v651 = vsub.f32 %v603, %v645
        %v652 = vsub.f32 %v646, %v570
        %v653 = vsub.f32 %v647, %v571
        %v654 = vsub.f32 %v648, %v583
        %v655 = vsub.f32 %v649, %v584
        %v656 = vsub.f32 %v650, %v596
        %v657 = vsub.f32 %v651, %v597
        %vm658 = vcmask 64512
        %v660 = vsel %vm658, %v538, 0
        %662 = vmatpush.msra.mxu0 0.0
        %663 = vmatpush.msra.mxu0 0.0
        %664 = vmatpush.msra.mxu0 0.0
        %665 = vmatpush.msra.mxu0 0.0
        %666 = vmatpush.msra.mxu0 0.0
        %667 = vmatpush.msra.mxu0 0.0
        %668 = vmatpush.msra.mxu0 0.0
        %669 = vmatpush.msra.mxu0 0.0
        %670 = vmatpush.msra.mxu0 0.0
        %671 = vmatpush.msra.mxu0 0.0
        %672 = vmatpush.msra.mxu0 0.0
        %673 = vmatpush.msra.mxu0 0.0
        %674 = vmatpush.msra.mxu0 0.0
        %675 = vmatpush.msra.mxu0 0.0
        %676 = vmatpush.msra.mxu0 0.0
        %v677 = vand.u32 %v541, 4294901760
        %678 = vmatpush.msra.mxu0 %v677
        %v679 = vand.u32 %v660, 4294901760
        %v680 = vsub.f32 %v660, %v679
        %v681 = vand.u32 %v680, 4294901760
        %v682 = vsub.f32 %v680, %v681
        %v683 = vand.u32 %v682, 4294901760
        %684 = vmatmul.f32.gmra.mxu0 %v683
        %v685 = vpop.f32.mrf.mxu0
        %v686 = vadd.f32 0.0, %v685
        %687 = vdwg.mxu0
        %688 = vmatpush.msra.mxu0 0.0
        %689 = vmatpush.msra.mxu0 0.0
        %690 = vmatpush.msra.mxu0 0.0
        %691 = vmatpush.msra.mxu0 0.0
        %692 = vmatpush.msra.mxu0 0.0
        %693 = vmatpush.msra.mxu0 0.0
        %694 = vmatpush.msra.mxu0 0.0
        %695 = vmatpush.msra.mxu0 0.0
        %696 = vmatpush.msra.mxu0 0.0
        %697 = vmatpush.msra.mxu0 0.0
        %698 = vmatpush.msra.mxu0 0.0
        %699 = vmatpush.msra.mxu0 0.0
        %700 = vmatpush.msra.mxu0 0.0
        %701 = vmatpush.msra.mxu0 0.0
        %702 = vmatpush.msra.mxu0 0.0
        %v703 = vand.u32 %v541, 4294901760
        %v704 = vsub.f32 %v541, %v703
        %v705 = vand.u32 %v704, 4294901760
        %v706 = vsub.f32 %v704, %v705
        %v707 = vand.u32 %v706, 4294901760
        %708 = vmatpush.msra.mxu0 %v707
        %v709 = vand.u32 %v660, 4294901760
        %710 = vmatmul.f32.gmra.mxu0 %v709
        %v711 = vpop.f32.mrf.mxu0
        %v712 = vadd.f32 %v686, %v711
        %713 = vdwg.mxu0
        %714 = vmatpush.msra.mxu0 0.0
        %715 = vmatpush.msra.mxu0 0.0
        %716 = vmatpush.msra.mxu0 0.0
        %717 = vmatpush.msra.mxu0 0.0
        %718 = vmatpush.msra.mxu0 0.0
        %719 = vmatpush.msra.mxu0 0.0
        %720 = vmatpush.msra.mxu0 0.0
        %721 = vmatpush.msra.mxu0 0.0
        %722 = vmatpush.msra.mxu0 0.0
        %723 = vmatpush.msra.mxu0 0.0
        %724 = vmatpush.msra.mxu0 0.0
        %725 = vmatpush.msra.mxu0 0.0
        %726 = vmatpush.msra.mxu0 0.0
        %727 = vmatpush.msra.mxu0 0.0
        %728 = vmatpush.msra.mxu0 0.0
        %v729 = vand.u32 %v541, 4294901760
        %v730 = vsub.f32 %v541, %v729
        %731 = vmatpush.msra.mxu0 %v730
        %v732 = vand.u32 %v660, 4294901760
        %v733 = vsub.f32 %v660, %v732
        %734 = vmatmul.f32.gmra.mxu0 %v733
        %v735 = vpop.f32.mrf.mxu0
        %v736 = vadd.f32 %v712, %v735
        %737 = vdwg.mxu0
        %738 = vmatpush.msra.mxu0 0.0
        %739 = vmatpush.msra.mxu0 0.0
        %740 = vmatpush.msra.mxu0 0.0
        %741 = vmatpush.msra.mxu0 0.0
        %742 = vmatpush.msra.mxu0 0.0
        %743 = vmatpush.msra.mxu0 0.0
        %744 = vmatpush.msra.mxu0 0.0
        %745 = vmatpush.msra.mxu0 0.0
        %746 = vmatpush.msra.mxu0 0.0
        %747 = vmatpush.msra.mxu0 0.0
        %748 = vmatpush.msra.mxu0 0.0
        %749 = vmatpush.msra.mxu0 0.0
        %750 = vmatpush.msra.mxu0 0.0
        %751 = vmatpush.msra.mxu0 0.0
        %752 = vmatpush.msra.mxu0 0.0
        %v753 = vand.u32 %v541, 4294901760
        %754 = vmatpush.msra.mxu0 %v753
        %v755 = vand.u32 %v660, 4294901760
        %v756 = vsub.f32 %v660, %v755
        %v757 = vand.u32 %v756, 4294901760
        %758 = vmatmul.f32.gmra.mxu0 %v757
        %v759 = vpop.f32.mrf.mxu0
        %v760 = vadd.f32 %v736, %v759
        %761 = vdwg.mxu0
        %762 = vmatpush.msra.mxu0 0.0
        %763 = vmatpush.msra.mxu0 0.0
        %764 = vmatpush.msra.mxu0 0.0
        %765 = vmatpush.msra.mxu0 0.0
        %766 = vmatpush.msra.mxu0 0.0
        %767 = vmatpush.msra.mxu0 0.0
        %768 = vmatpush.msra.mxu0 0.0
        %769 = vmatpush.msra.mxu0 0.0
        %770 = vmatpush.msra.mxu0 0.0
        %771 = vmatpush.msra.mxu0 0.0
        %772 = vmatpush.msra.mxu0 0.0
        %773 = vmatpush.msra.mxu0 0.0
        %774 = vmatpush.msra.mxu0 0.0
        %775 = vmatpush.msra.mxu0 0.0
        %776 = vmatpush.msra.mxu0 0.0
        %v777 = vand.u32 %v541, 4294901760
        %v778 = vsub.f32 %v541, %v777
        %v779 = vand.u32 %v778, 4294901760
        %780 = vmatpush.msra.mxu0 %v779
        %v781 = vand.u32 %v660, 4294901760
        %782 = vmatmul.f32.gmra.mxu0 %v781
        %v783 = vpop.f32.mrf.mxu0
        %v784 = vadd.f32 %v760, %v783
        %785 = vdwg.mxu0
        %786 = vmatpush.msra.mxu0 0.0
        %787 = vmatpush.msra.mxu0 0.0
        %788 = vmatpush.msra.mxu0 0.0
        %789 = vmatpush.msra.mxu0 0.0
        %790 = vmatpush.msra.mxu0 0.0
        %791 = vmatpush.msra.mxu0 0.0
        %792 = vmatpush.msra.mxu0 0.0
        %793 = vmatpush.msra.mxu0 0.0
        %794 = vmatpush.msra.mxu0 0.0
        %795 = vmatpush.msra.mxu0 0.0
        %796 = vmatpush.msra.mxu0 0.0
        %797 = vmatpush.msra.mxu0 0.0
        %798 = vmatpush.msra.mxu0 0.0
        %799 = vmatpush.msra.mxu0 0.0
        %800 = vmatpush.msra.mxu0 0.0
        %v801 = vand.u32 %v541, 4294901760
        %802 = vmatpush.msra.mxu0 %v801
        %v803 = vand.u32 %v660, 4294901760
        %804 = vmatmul.f32.gmra.mxu0 %v803
        %v805 = vpop.f32.mrf.mxu0
        %v806 = vadd.f32 %v784, %v805
        %807 = vdwg.mxu0
        %v809 = vsel %vm658, %v539, 0
        %811 = vmatpush.msra.mxu0 0.0
        %812 = vmatpush.msra.mxu0 0.0
        %813 = vmatpush.msra.mxu0 0.0
        %814 = vmatpush.msra.mxu0 0.0
        %815 = vmatpush.msra.mxu0 0.0
        %816 = vmatpush.msra.mxu0 0.0
        %817 = vmatpush.msra.mxu0 0.0
        %818 = vmatpush.msra.mxu0 0.0
        %819 = vmatpush.msra.mxu0 0.0
        %820 = vmatpush.msra.mxu0 0.0
        %821 = vmatpush.msra.mxu0 0.0
        %822 = vmatpush.msra.mxu0 0.0
        %823 = vmatpush.msra.mxu0 0.0
        %824 = vmatpush.msra.mxu0 0.0
        %825 = vmatpush.msra.mxu0 0.0
        %v826 = vand.u32 %v542, 4294901760
        %827 = vmatpush.msra.mxu0 %v826
        %v828 = vand.u32 %v809, 4294901760
        %v829 = vsub.f32 %v809, %v828
        %v830 = vand.u32 %v829, 4294901760
        %v831 = vsub.f32 %v829, %v830
        %v832 = vand.u32 %v831, 4294901760
        %833 = vmatmul.f32.gmra.mxu0 %v832
        %v834 = vpop.f32.mrf.mxu0
        %v835 = vadd.f32 0.0, %v834
        %836 = vdwg.mxu0
        %837 = vmatpush.msra.mxu0 0.0
        %838 = vmatpush.msra.mxu0 0.0
        %839 = vmatpush.msra.mxu0 0.0
        %840 = vmatpush.msra.mxu0 0.0
        %841 = vmatpush.msra.mxu0 0.0
        %842 = vmatpush.msra.mxu0 0.0
        %843 = vmatpush.msra.mxu0 0.0
        %844 = vmatpush.msra.mxu0 0.0
        %845 = vmatpush.msra.mxu0 0.0
        %846 = vmatpush.msra.mxu0 0.0
        %847 = vmatpush.msra.mxu0 0.0
        %848 = vmatpush.msra.mxu0 0.0
        %849 = vmatpush.msra.mxu0 0.0
        %850 = vmatpush.msra.mxu0 0.0
        %851 = vmatpush.msra.mxu0 0.0
        %v852 = vand.u32 %v542, 4294901760
        %v853 = vsub.f32 %v542, %v852
        %v854 = vand.u32 %v853, 4294901760
        %v855 = vsub.f32 %v853, %v854
        %v856 = vand.u32 %v855, 4294901760
        %857 = vmatpush.msra.mxu0 %v856
        %v858 = vand.u32 %v809, 4294901760
        %859 = vmatmul.f32.gmra.mxu0 %v858
        %v860 = vpop.f32.mrf.mxu0
        %v861 = vadd.f32 %v835, %v860
        %862 = vdwg.mxu0
        %863 = vmatpush.msra.mxu0 0.0
        %864 = vmatpush.msra.mxu0 0.0
        %865 = vmatpush.msra.mxu0 0.0
        %866 = vmatpush.msra.mxu0 0.0
        %867 = vmatpush.msra.mxu0 0.0
        %868 = vmatpush.msra.mxu0 0.0
        %869 = vmatpush.msra.mxu0 0.0
        %870 = vmatpush.msra.mxu0 0.0
        %871 = vmatpush.msra.mxu0 0.0
        %872 = vmatpush.msra.mxu0 0.0
        %873 = vmatpush.msra.mxu0 0.0
        %874 = vmatpush.msra.mxu0 0.0
        %875 = vmatpush.msra.mxu0 0.0
        %876 = vmatpush.msra.mxu0 0.0
        %877 = vmatpush.msra.mxu0 0.0
        %v878 = vand.u32 %v542, 4294901760
        %v879 = vsub.f32 %v542, %v878
        %880 = vmatpush.msra.mxu0 %v879
        %v881 = vand.u32 %v809, 4294901760
        %v882 = vsub.f32 %v809, %v881
        %883 = vmatmul.f32.gmra.mxu0 %v882
        %v884 = vpop.f32.mrf.mxu0
        %v885 = vadd.f32 %v861, %v884
        %886 = vdwg.mxu0
        %887 = vmatpush.msra.mxu0 0.0
        %888 = vmatpush.msra.mxu0 0.0
        %889 = vmatpush.msra.mxu0 0.0
        %890 = vmatpush.msra.mxu0 0.0
        %891 = vmatpush.msra.mxu0 0.0
        %892 = vmatpush.msra.mxu0 0.0
        %893 = vmatpush.msra.mxu0 0.0
        %894 = vmatpush.msra.mxu0 0.0
        %895 = vmatpush.msra.mxu0 0.0
        %896 = vmatpush.msra.mxu0 0.0
        %897 = vmatpush.msra.mxu0 0.0
        %898 = vmatpush.msra.mxu0 0.0
        %899 = vmatpush.msra.mxu0 0.0
        %900 = vmatpush.msra.mxu0 0.0
        %901 = vmatpush.msra.mxu0 0.0
        %v902 = vand.u32 %v542, 4294901760
        %903 = vmatpush.msra.mxu0 %v902
        %v904 = vand.u32 %v809, 4294901760
        %v905 = vsub.f32 %v809, %v904
        %v906 = vand.u32 %v905, 4294901760
        %907 = vmatmul.f32.gmra.mxu0 %v906
        %v908 = vpop.f32.mrf.mxu0
        %v909 = vadd.f32 %v885, %v908
        %910 = vdwg.mxu0
        %911 = vmatpush.msra.mxu0 0.0
        %912 = vmatpush.msra.mxu0 0.0
        %913 = vmatpush.msra.mxu0 0.0
        %914 = vmatpush.msra.mxu0 0.0
        %915 = vmatpush.msra.mxu0 0.0
        %916 = vmatpush.msra.mxu0 0.0
        %917 = vmatpush.msra.mxu0 0.0
        %918 = vmatpush.msra.mxu0 0.0
        %919 = vmatpush.msra.mxu0 0.0
        %920 = vmatpush.msra.mxu0 0.0
        %921 = vmatpush.msra.mxu0 0.0
        %922 = vmatpush.msra.mxu0 0.0
        %923 = vmatpush.msra.mxu0 0.0
        %924 = vmatpush.msra.mxu0 0.0
        %925 = vmatpush.msra.mxu0 0.0
        %v926 = vand.u32 %v542, 4294901760
        %v927 = vsub.f32 %v542, %v926
        %v928 = vand.u32 %v927, 4294901760
        %929 = vmatpush.msra.mxu0 %v928
        %v930 = vand.u32 %v809, 4294901760
        %931 = vmatmul.f32.gmra.mxu0 %v930
        %v932 = vpop.f32.mrf.mxu0
        %v933 = vadd.f32 %v909, %v932
        %934 = vdwg.mxu0
        %935 = vmatpush.msra.mxu0 0.0
        %936 = vmatpush.msra.mxu0 0.0
        %937 = vmatpush.msra.mxu0 0.0
        %938 = vmatpush.msra.mxu0 0.0
        %939 = vmatpush.msra.mxu0 0.0
        %940 = vmatpush.msra.mxu0 0.0
        %941 = vmatpush.msra.mxu0 0.0
        %942 = vmatpush.msra.mxu0 0.0
        %943 = vmatpush.msra.mxu0 0.0
        %944 = vmatpush.msra.mxu0 0.0
        %945 = vmatpush.msra.mxu0 0.0
        %946 = vmatpush.msra.mxu0 0.0
        %947 = vmatpush.msra.mxu0 0.0
        %948 = vmatpush.msra.mxu0 0.0
        %949 = vmatpush.msra.mxu0 0.0
        %v950 = vand.u32 %v542, 4294901760
        %951 = vmatpush.msra.mxu0 %v950
        %v952 = vand.u32 %v809, 4294901760
        %953 = vmatmul.f32.gmra.mxu0 %v952
        %v954 = vpop.f32.mrf.mxu0
        %v955 = vadd.f32 %v933, %v954
        %956 = vdwg.mxu0
        %v958 = vsel %vm658, %v540, 0
        %960 = vmatpush.msra.mxu0 0.0
        %961 = vmatpush.msra.mxu0 0.0
        %962 = vmatpush.msra.mxu0 0.0
        %963 = vmatpush.msra.mxu0 0.0
        %964 = vmatpush.msra.mxu0 0.0
        %965 = vmatpush.msra.mxu0 0.0
        %966 = vmatpush.msra.mxu0 0.0
        %967 = vmatpush.msra.mxu0 0.0
        %968 = vmatpush.msra.mxu0 0.0
        %969 = vmatpush.msra.mxu0 0.0
        %970 = vmatpush.msra.mxu0 0.0
        %971 = vmatpush.msra.mxu0 0.0
        %972 = vmatpush.msra.mxu0 0.0
        %973 = vmatpush.msra.mxu0 0.0
        %974 = vmatpush.msra.mxu0 0.0
        %v975 = vand.u32 %v543, 4294901760
        %976 = vmatpush.msra.mxu0 %v975
        %v977 = vand.u32 %v958, 4294901760
        %v978 = vsub.f32 %v958, %v977
        %v979 = vand.u32 %v978, 4294901760
        %v980 = vsub.f32 %v978, %v979
        %v981 = vand.u32 %v980, 4294901760
        %982 = vmatmul.f32.gmra.mxu0 %v981
        %v983 = vpop.f32.mrf.mxu0
        %v984 = vadd.f32 0.0, %v983
        %985 = vdwg.mxu0
        %986 = vmatpush.msra.mxu0 0.0
        %987 = vmatpush.msra.mxu0 0.0
        %988 = vmatpush.msra.mxu0 0.0
        %989 = vmatpush.msra.mxu0 0.0
        %990 = vmatpush.msra.mxu0 0.0
        %991 = vmatpush.msra.mxu0 0.0
        %992 = vmatpush.msra.mxu0 0.0
        %993 = vmatpush.msra.mxu0 0.0
        %994 = vmatpush.msra.mxu0 0.0
        %995 = vmatpush.msra.mxu0 0.0
        %996 = vmatpush.msra.mxu0 0.0
        %997 = vmatpush.msra.mxu0 0.0
        %998 = vmatpush.msra.mxu0 0.0
        %999 = vmatpush.msra.mxu0 0.0
        %1000 = vmatpush.msra.mxu0 0.0
        %v1001 = vand.u32 %v543, 4294901760
        %v1002 = vsub.f32 %v543, %v1001
        %v1003 = vand.u32 %v1002, 4294901760
        %v1004 = vsub.f32 %v1002, %v1003
        %v1005 = vand.u32 %v1004, 4294901760
        %1006 = vmatpush.msra.mxu0 %v1005
        %v1007 = vand.u32 %v958, 4294901760
        %1008 = vmatmul.f32.gmra.mxu0 %v1007
        %v1009 = vpop.f32.mrf.mxu0
        %v1010 = vadd.f32 %v984, %v1009
        %1011 = vdwg.mxu0
        %1012 = vmatpush.msra.mxu0 0.0
        %1013 = vmatpush.msra.mxu0 0.0
        %1014 = vmatpush.msra.mxu0 0.0
        %1015 = vmatpush.msra.mxu0 0.0
        %1016 = vmatpush.msra.mxu0 0.0
        %1017 = vmatpush.msra.mxu0 0.0
        %1018 = vmatpush.msra.mxu0 0.0
        %1019 = vmatpush.msra.mxu0 0.0
        %1020 = vmatpush.msra.mxu0 0.0
        %1021 = vmatpush.msra.mxu0 0.0
        %1022 = vmatpush.msra.mxu0 0.0
        %1023 = vmatpush.msra.mxu0 0.0
        %1024 = vmatpush.msra.mxu0 0.0
        %1025 = vmatpush.msra.mxu0 0.0
        %1026 = vmatpush.msra.mxu0 0.0
        %v1027 = vand.u32 %v543, 4294901760
        %v1028 = vsub.f32 %v543, %v1027
        %1029 = vmatpush.msra.mxu0 %v1028
        %v1030 = vand.u32 %v958, 4294901760
        %v1031 = vsub.f32 %v958, %v1030
        %1032 = vmatmul.f32.gmra.mxu0 %v1031
        %v1033 = vpop.f32.mrf.mxu0
        %v1034 = vadd.f32 %v1010, %v1033
        %1035 = vdwg.mxu0
        %1036 = vmatpush.msra.mxu0 0.0
        %1037 = vmatpush.msra.mxu0 0.0
        %1038 = vmatpush.msra.mxu0 0.0
        %1039 = vmatpush.msra.mxu0 0.0
        %1040 = vmatpush.msra.mxu0 0.0
        %1041 = vmatpush.msra.mxu0 0.0
        %1042 = vmatpush.msra.mxu0 0.0
        %1043 = vmatpush.msra.mxu0 0.0
        %1044 = vmatpush.msra.mxu0 0.0
        %1045 = vmatpush.msra.mxu0 0.0
        %1046 = vmatpush.msra.mxu0 0.0
        %1047 = vmatpush.msra.mxu0 0.0
        %1048 = vmatpush.msra.mxu0 0.0
        %1049 = vmatpush.msra.mxu0 0.0
        %1050 = vmatpush.msra.mxu0 0.0
        %v1051 = vand.u32 %v543, 4294901760
        %1052 = vmatpush.msra.mxu0 %v1051
        %v1053 = vand.u32 %v958, 4294901760
        %v1054 = vsub.f32 %v958, %v1053
        %v1055 = vand.u32 %v1054, 4294901760
        %1056 = vmatmul.f32.gmra.mxu0 %v1055
        %v1057 = vpop.f32.mrf.mxu0
        %v1058 = vadd.f32 %v1034, %v1057
        %1059 = vdwg.mxu0
        %1060 = vmatpush.msra.mxu0 0.0
        %1061 = vmatpush.msra.mxu0 0.0
        %1062 = vmatpush.msra.mxu0 0.0
        %1063 = vmatpush.msra.mxu0 0.0
        %1064 = vmatpush.msra.mxu0 0.0
        %1065 = vmatpush.msra.mxu0 0.0
        %1066 = vmatpush.msra.mxu0 0.0
        %1067 = vmatpush.msra.mxu0 0.0
        %1068 = vmatpush.msra.mxu0 0.0
        %1069 = vmatpush.msra.mxu0 0.0
        %1070 = vmatpush.msra.mxu0 0.0
        %1071 = vmatpush.msra.mxu0 0.0
        %1072 = vmatpush.msra.mxu0 0.0
        %1073 = vmatpush.msra.mxu0 0.0
        %1074 = vmatpush.msra.mxu0 0.0
        %v1075 = vand.u32 %v543, 4294901760
        %v1076 = vsub.f32 %v543, %v1075
        %v1077 = vand.u32 %v1076, 4294901760
        %1078 = vmatpush.msra.mxu0 %v1077
        %v1079 = vand.u32 %v958, 4294901760
        %1080 = vmatmul.f32.gmra.mxu0 %v1079
        %v1081 = vpop.f32.mrf.mxu0
        %v1082 = vadd.f32 %v1058, %v1081
        %1083 = vdwg.mxu0
        %1084 = vmatpush.msra.mxu0 0.0
        %1085 = vmatpush.msra.mxu0 0.0
        %1086 = vmatpush.msra.mxu0 0.0
        %1087 = vmatpush.msra.mxu0 0.0
        %1088 = vmatpush.msra.mxu0 0.0
        %1089 = vmatpush.msra.mxu0 0.0
        %1090 = vmatpush.msra.mxu0 0.0
        %1091 = vmatpush.msra.mxu0 0.0
        %1092 = vmatpush.msra.mxu0 0.0
        %1093 = vmatpush.msra.mxu0 0.0
        %1094 = vmatpush.msra.mxu0 0.0
        %1095 = vmatpush.msra.mxu0 0.0
        %1096 = vmatpush.msra.mxu0 0.0
        %1097 = vmatpush.msra.mxu0 0.0
        %1098 = vmatpush.msra.mxu0 0.0
        %v1099 = vand.u32 %v543, 4294901760
        %1100 = vmatpush.msra.mxu0 %v1099
        %v1101 = vand.u32 %v958, 4294901760
        %1102 = vmatmul.f32.gmra.mxu0 %v1101
        %v1103 = vpop.f32.mrf.mxu0
        %v1104 = vadd.f32 %v1082, %v1103
        %1105 = vdwg.mxu0
        %1108 = vset.pattern.permute.xlu0 0
        %1109 = vperm.xlu0 %1108, %v646
        %v1110 = vpop.permute.xlu0 %1109
        %1111 = vset.pattern.permute.xlu0 0
        %1112 = vperm.xlu0 %1111, %v647
        %v1113 = vpop.permute.xlu0 %1112
        %v1114 = vlaneseq
        %v1115 = vand.u32 %v1114, 127
        %v1116 = vperm.slane %v1110, %v1115
        %v1117 = vperm.slane %v1113, %v1115
        %vm1118 = vcmask 1041409
        %v1119 = vsel %vm1118, %v1117, %v1116
        %v1120 = vsel %vm658, %v1119, 0
        %1122 = vmatpush.msra.mxu0 0.0
        %1123 = vmatpush.msra.mxu0 0.0
        %1124 = vmatpush.msra.mxu0 0.0
        %1125 = vmatpush.msra.mxu0 0.0
        %1126 = vmatpush.msra.mxu0 0.0
        %1127 = vmatpush.msra.mxu0 0.0
        %1128 = vmatpush.msra.mxu0 0.0
        %1129 = vmatpush.msra.mxu0 0.0
        %1130 = vmatpush.msra.mxu0 0.0
        %1131 = vmatpush.msra.mxu0 0.0
        %1132 = vmatpush.msra.mxu0 0.0
        %1133 = vmatpush.msra.mxu0 0.0
        %1134 = vmatpush.msra.mxu0 0.0
        %1135 = vmatpush.msra.mxu0 0.0
        %1136 = vmatpush.msra.mxu0 0.0
        %v1137 = vand.u32 %v541, 4294901760
        %1138 = vmatpush.msra.mxu0 %v1137
        %v1139 = vand.u32 %v1120, 4294901760
        %v1140 = vsub.f32 %v1120, %v1139
        %v1141 = vand.u32 %v1140, 4294901760
        %v1142 = vsub.f32 %v1140, %v1141
        %v1143 = vand.u32 %v1142, 4294901760
        %1144 = vmatmul.f32.gmra.mxu0 %v1143
        %v1145 = vpop.f32.mrf.mxu0
        %v1146 = vadd.f32 0.0, %v1145
        %1147 = vdwg.mxu0
        %1148 = vmatpush.msra.mxu0 0.0
        %1149 = vmatpush.msra.mxu0 0.0
        %1150 = vmatpush.msra.mxu0 0.0
        %1151 = vmatpush.msra.mxu0 0.0
        %1152 = vmatpush.msra.mxu0 0.0
        %1153 = vmatpush.msra.mxu0 0.0
        %1154 = vmatpush.msra.mxu0 0.0
        %1155 = vmatpush.msra.mxu0 0.0
        %1156 = vmatpush.msra.mxu0 0.0
        %1157 = vmatpush.msra.mxu0 0.0
        %1158 = vmatpush.msra.mxu0 0.0
        %1159 = vmatpush.msra.mxu0 0.0
        %1160 = vmatpush.msra.mxu0 0.0
        %1161 = vmatpush.msra.mxu0 0.0
        %1162 = vmatpush.msra.mxu0 0.0
        %v1163 = vand.u32 %v541, 4294901760
        %v1164 = vsub.f32 %v541, %v1163
        %v1165 = vand.u32 %v1164, 4294901760
        %v1166 = vsub.f32 %v1164, %v1165
        %v1167 = vand.u32 %v1166, 4294901760
        %1168 = vmatpush.msra.mxu0 %v1167
        %v1169 = vand.u32 %v1120, 4294901760
        %1170 = vmatmul.f32.gmra.mxu0 %v1169
        %v1171 = vpop.f32.mrf.mxu0
        %v1172 = vadd.f32 %v1146, %v1171
        %1173 = vdwg.mxu0
        %1174 = vmatpush.msra.mxu0 0.0
        %1175 = vmatpush.msra.mxu0 0.0
        %1176 = vmatpush.msra.mxu0 0.0
        %1177 = vmatpush.msra.mxu0 0.0
        %1178 = vmatpush.msra.mxu0 0.0
        %1179 = vmatpush.msra.mxu0 0.0
        %1180 = vmatpush.msra.mxu0 0.0
        %1181 = vmatpush.msra.mxu0 0.0
        %1182 = vmatpush.msra.mxu0 0.0
        %1183 = vmatpush.msra.mxu0 0.0
        %1184 = vmatpush.msra.mxu0 0.0
        %1185 = vmatpush.msra.mxu0 0.0
        %1186 = vmatpush.msra.mxu0 0.0
        %1187 = vmatpush.msra.mxu0 0.0
        %1188 = vmatpush.msra.mxu0 0.0
        %v1189 = vand.u32 %v541, 4294901760
        %v1190 = vsub.f32 %v541, %v1189
        %1191 = vmatpush.msra.mxu0 %v1190
        %v1192 = vand.u32 %v1120, 4294901760
        %v1193 = vsub.f32 %v1120, %v1192
        %1194 = vmatmul.f32.gmra.mxu0 %v1193
        %v1195 = vpop.f32.mrf.mxu0
        %v1196 = vadd.f32 %v1172, %v1195
        %1197 = vdwg.mxu0
        %1198 = vmatpush.msra.mxu0 0.0
        %1199 = vmatpush.msra.mxu0 0.0
        %1200 = vmatpush.msra.mxu0 0.0
        %1201 = vmatpush.msra.mxu0 0.0
        %1202 = vmatpush.msra.mxu0 0.0
        %1203 = vmatpush.msra.mxu0 0.0
        %1204 = vmatpush.msra.mxu0 0.0
        %1205 = vmatpush.msra.mxu0 0.0
        %1206 = vmatpush.msra.mxu0 0.0
        %1207 = vmatpush.msra.mxu0 0.0
        %1208 = vmatpush.msra.mxu0 0.0
        %1209 = vmatpush.msra.mxu0 0.0
        %1210 = vmatpush.msra.mxu0 0.0
        %1211 = vmatpush.msra.mxu0 0.0
        %1212 = vmatpush.msra.mxu0 0.0
        %v1213 = vand.u32 %v541, 4294901760
        %1214 = vmatpush.msra.mxu0 %v1213
        %v1215 = vand.u32 %v1120, 4294901760
        %v1216 = vsub.f32 %v1120, %v1215
        %v1217 = vand.u32 %v1216, 4294901760
        %1218 = vmatmul.f32.gmra.mxu0 %v1217
        %v1219 = vpop.f32.mrf.mxu0
        %v1220 = vadd.f32 %v1196, %v1219
        %1221 = vdwg.mxu0
        %1222 = vmatpush.msra.mxu0 0.0
        %1223 = vmatpush.msra.mxu0 0.0
        %1224 = vmatpush.msra.mxu0 0.0
        %1225 = vmatpush.msra.mxu0 0.0
        %1226 = vmatpush.msra.mxu0 0.0
        %1227 = vmatpush.msra.mxu0 0.0
        %1228 = vmatpush.msra.mxu0 0.0
        %1229 = vmatpush.msra.mxu0 0.0
        %1230 = vmatpush.msra.mxu0 0.0
        %1231 = vmatpush.msra.mxu0 0.0
        %1232 = vmatpush.msra.mxu0 0.0
        %1233 = vmatpush.msra.mxu0 0.0
        %1234 = vmatpush.msra.mxu0 0.0
        %1235 = vmatpush.msra.mxu0 0.0
        %1236 = vmatpush.msra.mxu0 0.0
        %v1237 = vand.u32 %v541, 4294901760
        %v1238 = vsub.f32 %v541, %v1237
        %v1239 = vand.u32 %v1238, 4294901760
        %1240 = vmatpush.msra.mxu0 %v1239
        %v1241 = vand.u32 %v1120, 4294901760
        %1242 = vmatmul.f32.gmra.mxu0 %v1241
        %v1243 = vpop.f32.mrf.mxu0
        %v1244 = vadd.f32 %v1220, %v1243
        %1245 = vdwg.mxu0
        %1246 = vmatpush.msra.mxu0 0.0
        %1247 = vmatpush.msra.mxu0 0.0
        %1248 = vmatpush.msra.mxu0 0.0
        %1249 = vmatpush.msra.mxu0 0.0
        %1250 = vmatpush.msra.mxu0 0.0
        %1251 = vmatpush.msra.mxu0 0.0
        %1252 = vmatpush.msra.mxu0 0.0
        %1253 = vmatpush.msra.mxu0 0.0
        %1254 = vmatpush.msra.mxu0 0.0
        %1255 = vmatpush.msra.mxu0 0.0
        %1256 = vmatpush.msra.mxu0 0.0
        %1257 = vmatpush.msra.mxu0 0.0
        %1258 = vmatpush.msra.mxu0 0.0
        %1259 = vmatpush.msra.mxu0 0.0
        %1260 = vmatpush.msra.mxu0 0.0
        %v1261 = vand.u32 %v541, 4294901760
        %1262 = vmatpush.msra.mxu0 %v1261
        %v1263 = vand.u32 %v1120, 4294901760
        %1264 = vmatmul.f32.gmra.mxu0 %v1263
        %v1265 = vpop.f32.mrf.mxu0
        %v1266 = vadd.f32 %v1244, %v1265
        %1267 = vdwg.mxu0
        %1270 = vset.pattern.permute.xlu0 0
        %1271 = vperm.xlu0 %1270, %v648
        %v1272 = vpop.permute.xlu0 %1271
        %1273 = vset.pattern.permute.xlu0 0
        %1274 = vperm.xlu0 %1273, %v649
        %v1275 = vpop.permute.xlu0 %1274
        %v1276 = vperm.slane %v1272, %v1115
        %v1277 = vperm.slane %v1275, %v1115
        %v1278 = vsel %vm1118, %v1277, %v1276
        %v1279 = vsel %vm658, %v1278, 0
        %1281 = vmatpush.msra.mxu0 0.0
        %1282 = vmatpush.msra.mxu0 0.0
        %1283 = vmatpush.msra.mxu0 0.0
        %1284 = vmatpush.msra.mxu0 0.0
        %1285 = vmatpush.msra.mxu0 0.0
        %1286 = vmatpush.msra.mxu0 0.0
        %1287 = vmatpush.msra.mxu0 0.0
        %1288 = vmatpush.msra.mxu0 0.0
        %1289 = vmatpush.msra.mxu0 0.0
        %1290 = vmatpush.msra.mxu0 0.0
        %1291 = vmatpush.msra.mxu0 0.0
        %1292 = vmatpush.msra.mxu0 0.0
        %1293 = vmatpush.msra.mxu0 0.0
        %1294 = vmatpush.msra.mxu0 0.0
        %1295 = vmatpush.msra.mxu0 0.0
        %v1296 = vand.u32 %v542, 4294901760
        %1297 = vmatpush.msra.mxu0 %v1296
        %v1298 = vand.u32 %v1279, 4294901760
        %v1299 = vsub.f32 %v1279, %v1298
        %v1300 = vand.u32 %v1299, 4294901760
        %v1301 = vsub.f32 %v1299, %v1300
        %v1302 = vand.u32 %v1301, 4294901760
        %1303 = vmatmul.f32.gmra.mxu0 %v1302
        %v1304 = vpop.f32.mrf.mxu0
        %v1305 = vadd.f32 0.0, %v1304
        %1306 = vdwg.mxu0
        %1307 = vmatpush.msra.mxu0 0.0
        %1308 = vmatpush.msra.mxu0 0.0
        %1309 = vmatpush.msra.mxu0 0.0
        %1310 = vmatpush.msra.mxu0 0.0
        %1311 = vmatpush.msra.mxu0 0.0
        %1312 = vmatpush.msra.mxu0 0.0
        %1313 = vmatpush.msra.mxu0 0.0
        %1314 = vmatpush.msra.mxu0 0.0
        %1315 = vmatpush.msra.mxu0 0.0
        %1316 = vmatpush.msra.mxu0 0.0
        %1317 = vmatpush.msra.mxu0 0.0
        %1318 = vmatpush.msra.mxu0 0.0
        %1319 = vmatpush.msra.mxu0 0.0
        %1320 = vmatpush.msra.mxu0 0.0
        %1321 = vmatpush.msra.mxu0 0.0
        %v1322 = vand.u32 %v542, 4294901760
        %v1323 = vsub.f32 %v542, %v1322
        %v1324 = vand.u32 %v1323, 4294901760
        %v1325 = vsub.f32 %v1323, %v1324
        %v1326 = vand.u32 %v1325, 4294901760
        %1327 = vmatpush.msra.mxu0 %v1326
        %v1328 = vand.u32 %v1279, 4294901760
        %1329 = vmatmul.f32.gmra.mxu0 %v1328
        %v1330 = vpop.f32.mrf.mxu0
        %v1331 = vadd.f32 %v1305, %v1330
        %1332 = vdwg.mxu0
        %1333 = vmatpush.msra.mxu0 0.0
        %1334 = vmatpush.msra.mxu0 0.0
        %1335 = vmatpush.msra.mxu0 0.0
        %1336 = vmatpush.msra.mxu0 0.0
        %1337 = vmatpush.msra.mxu0 0.0
        %1338 = vmatpush.msra.mxu0 0.0
        %1339 = vmatpush.msra.mxu0 0.0
        %1340 = vmatpush.msra.mxu0 0.0
        %1341 = vmatpush.msra.mxu0 0.0
        %1342 = vmatpush.msra.mxu0 0.0
        %1343 = vmatpush.msra.mxu0 0.0
        %1344 = vmatpush.msra.mxu0 0.0
        %1345 = vmatpush.msra.mxu0 0.0
        %1346 = vmatpush.msra.mxu0 0.0
        %1347 = vmatpush.msra.mxu0 0.0
        %v1348 = vand.u32 %v542, 4294901760
        %v1349 = vsub.f32 %v542, %v1348
        %1350 = vmatpush.msra.mxu0 %v1349
        %v1351 = vand.u32 %v1279, 4294901760
        %v1352 = vsub.f32 %v1279, %v1351
        %1353 = vmatmul.f32.gmra.mxu0 %v1352
        %v1354 = vpop.f32.mrf.mxu0
        %v1355 = vadd.f32 %v1331, %v1354
        %1356 = vdwg.mxu0
        %1357 = vmatpush.msra.mxu0 0.0
        %1358 = vmatpush.msra.mxu0 0.0
        %1359 = vmatpush.msra.mxu0 0.0
        %1360 = vmatpush.msra.mxu0 0.0
        %1361 = vmatpush.msra.mxu0 0.0
        %1362 = vmatpush.msra.mxu0 0.0
        %1363 = vmatpush.msra.mxu0 0.0
        %1364 = vmatpush.msra.mxu0 0.0
        %1365 = vmatpush.msra.mxu0 0.0
        %1366 = vmatpush.msra.mxu0 0.0
        %1367 = vmatpush.msra.mxu0 0.0
        %1368 = vmatpush.msra.mxu0 0.0
        %1369 = vmatpush.msra.mxu0 0.0
        %1370 = vmatpush.msra.mxu0 0.0
        %1371 = vmatpush.msra.mxu0 0.0
        %v1372 = vand.u32 %v542, 4294901760
        %1373 = vmatpush.msra.mxu0 %v1372
        %v1374 = vand.u32 %v1279, 4294901760
        %v1375 = vsub.f32 %v1279, %v1374
        %v1376 = vand.u32 %v1375, 4294901760
        %1377 = vmatmul.f32.gmra.mxu0 %v1376
        %v1378 = vpop.f32.mrf.mxu0
        %v1379 = vadd.f32 %v1355, %v1378
        %1380 = vdwg.mxu0
        %1381 = vmatpush.msra.mxu0 0.0
        %1382 = vmatpush.msra.mxu0 0.0
        %1383 = vmatpush.msra.mxu0 0.0
        %1384 = vmatpush.msra.mxu0 0.0
        %1385 = vmatpush.msra.mxu0 0.0
        %1386 = vmatpush.msra.mxu0 0.0
        %1387 = vmatpush.msra.mxu0 0.0
        %1388 = vmatpush.msra.mxu0 0.0
        %1389 = vmatpush.msra.mxu0 0.0
        %1390 = vmatpush.msra.mxu0 0.0
        %1391 = vmatpush.msra.mxu0 0.0
        %1392 = vmatpush.msra.mxu0 0.0
        %1393 = vmatpush.msra.mxu0 0.0
        %1394 = vmatpush.msra.mxu0 0.0
        %1395 = vmatpush.msra.mxu0 0.0
        %v1396 = vand.u32 %v542, 4294901760
        %v1397 = vsub.f32 %v542, %v1396
        %v1398 = vand.u32 %v1397, 4294901760
        %1399 = vmatpush.msra.mxu0 %v1398
        %v1400 = vand.u32 %v1279, 4294901760
        %1401 = vmatmul.f32.gmra.mxu0 %v1400
        %v1402 = vpop.f32.mrf.mxu0
        %v1403 = vadd.f32 %v1379, %v1402
        %1404 = vdwg.mxu0
        %1405 = vmatpush.msra.mxu0 0.0
        %1406 = vmatpush.msra.mxu0 0.0
        %1407 = vmatpush.msra.mxu0 0.0
        %1408 = vmatpush.msra.mxu0 0.0
        %1409 = vmatpush.msra.mxu0 0.0
        %1410 = vmatpush.msra.mxu0 0.0
        %1411 = vmatpush.msra.mxu0 0.0
        %1412 = vmatpush.msra.mxu0 0.0
        %1413 = vmatpush.msra.mxu0 0.0
        %1414 = vmatpush.msra.mxu0 0.0
        %1415 = vmatpush.msra.mxu0 0.0
        %1416 = vmatpush.msra.mxu0 0.0
        %1417 = vmatpush.msra.mxu0 0.0
        %1418 = vmatpush.msra.mxu0 0.0
        %1419 = vmatpush.msra.mxu0 0.0
        %v1420 = vand.u32 %v542, 4294901760
        %1421 = vmatpush.msra.mxu0 %v1420
        %v1422 = vand.u32 %v1279, 4294901760
        %1423 = vmatmul.f32.gmra.mxu0 %v1422
        %v1424 = vpop.f32.mrf.mxu0
        %v1425 = vadd.f32 %v1403, %v1424
        %1426 = vdwg.mxu0
        %1429 = vset.pattern.permute.xlu0 0
        %1430 = vperm.xlu0 %1429, %v650
        %v1431 = vpop.permute.xlu0 %1430
        %1432 = vset.pattern.permute.xlu0 0
        %1433 = vperm.xlu0 %1432, %v651
        %v1434 = vpop.permute.xlu0 %1433
        %v1435 = vperm.slane %v1431, %v1115
        %v1436 = vperm.slane %v1434, %v1115
        %v1437 = vsel %vm1118, %v1436, %v1435
        %v1438 = vsel %vm658, %v1437, 0
        %1440 = vmatpush.msra.mxu0 0.0
        %1441 = vmatpush.msra.mxu0 0.0
        %1442 = vmatpush.msra.mxu0 0.0
        %1443 = vmatpush.msra.mxu0 0.0
        %1444 = vmatpush.msra.mxu0 0.0
        %1445 = vmatpush.msra.mxu0 0.0
        %1446 = vmatpush.msra.mxu0 0.0
        %1447 = vmatpush.msra.mxu0 0.0
        %1448 = vmatpush.msra.mxu0 0.0
        %1449 = vmatpush.msra.mxu0 0.0
        %1450 = vmatpush.msra.mxu0 0.0
        %1451 = vmatpush.msra.mxu0 0.0
        %1452 = vmatpush.msra.mxu0 0.0
        %1453 = vmatpush.msra.mxu0 0.0
        %1454 = vmatpush.msra.mxu0 0.0
        %v1455 = vand.u32 %v543, 4294901760
        %1456 = vmatpush.msra.mxu0 %v1455
        %v1457 = vand.u32 %v1438, 4294901760
        %v1458 = vsub.f32 %v1438, %v1457
        %v1459 = vand.u32 %v1458, 4294901760
        %v1460 = vsub.f32 %v1458, %v1459
        %v1461 = vand.u32 %v1460, 4294901760
        %1462 = vmatmul.f32.gmra.mxu0 %v1461
        %v1463 = vpop.f32.mrf.mxu0
        %v1464 = vadd.f32 0.0, %v1463
        %1465 = vdwg.mxu0
        %1466 = vmatpush.msra.mxu0 0.0
        %1467 = vmatpush.msra.mxu0 0.0
        %1468 = vmatpush.msra.mxu0 0.0
        %1469 = vmatpush.msra.mxu0 0.0
        %1470 = vmatpush.msra.mxu0 0.0
        %1471 = vmatpush.msra.mxu0 0.0
        %1472 = vmatpush.msra.mxu0 0.0
        %1473 = vmatpush.msra.mxu0 0.0
        %1474 = vmatpush.msra.mxu0 0.0
        %1475 = vmatpush.msra.mxu0 0.0
        %1476 = vmatpush.msra.mxu0 0.0
        %1477 = vmatpush.msra.mxu0 0.0
        %1478 = vmatpush.msra.mxu0 0.0
        %1479 = vmatpush.msra.mxu0 0.0
        %1480 = vmatpush.msra.mxu0 0.0
        %v1481 = vand.u32 %v543, 4294901760
        %v1482 = vsub.f32 %v543, %v1481
        %v1483 = vand.u32 %v1482, 4294901760
        %v1484 = vsub.f32 %v1482, %v1483
        %v1485 = vand.u32 %v1484, 4294901760
        %1486 = vmatpush.msra.mxu0 %v1485
        %v1487 = vand.u32 %v1438, 4294901760
        %1488 = vmatmul.f32.gmra.mxu0 %v1487
        %v1489 = vpop.f32.mrf.mxu0
        %v1490 = vadd.f32 %v1464, %v1489
        %1491 = vdwg.mxu0
        %1492 = vmatpush.msra.mxu0 0.0
        %1493 = vmatpush.msra.mxu0 0.0
        %1494 = vmatpush.msra.mxu0 0.0
        %1495 = vmatpush.msra.mxu0 0.0
        %1496 = vmatpush.msra.mxu0 0.0
        %1497 = vmatpush.msra.mxu0 0.0
        %1498 = vmatpush.msra.mxu0 0.0
        %1499 = vmatpush.msra.mxu0 0.0
        %1500 = vmatpush.msra.mxu0 0.0
        %1501 = vmatpush.msra.mxu0 0.0
        %1502 = vmatpush.msra.mxu0 0.0
        %1503 = vmatpush.msra.mxu0 0.0
        %1504 = vmatpush.msra.mxu0 0.0
        %1505 = vmatpush.msra.mxu0 0.0
        %1506 = vmatpush.msra.mxu0 0.0
        %v1507 = vand.u32 %v543, 4294901760
        %v1508 = vsub.f32 %v543, %v1507
        %1509 = vmatpush.msra.mxu0 %v1508
        %v1510 = vand.u32 %v1438, 4294901760
        %v1511 = vsub.f32 %v1438, %v1510
        %1512 = vmatmul.f32.gmra.mxu0 %v1511
        %v1513 = vpop.f32.mrf.mxu0
        %v1514 = vadd.f32 %v1490, %v1513
        %1515 = vdwg.mxu0
        %1516 = vmatpush.msra.mxu0 0.0
        %1517 = vmatpush.msra.mxu0 0.0
        %1518 = vmatpush.msra.mxu0 0.0
        %1519 = vmatpush.msra.mxu0 0.0
        %1520 = vmatpush.msra.mxu0 0.0
        %1521 = vmatpush.msra.mxu0 0.0
        %1522 = vmatpush.msra.mxu0 0.0
        %1523 = vmatpush.msra.mxu0 0.0
        %1524 = vmatpush.msra.mxu0 0.0
        %1525 = vmatpush.msra.mxu0 0.0
        %1526 = vmatpush.msra.mxu0 0.0
        %1527 = vmatpush.msra.mxu0 0.0
        %1528 = vmatpush.msra.mxu0 0.0
        %1529 = vmatpush.msra.mxu0 0.0
        %1530 = vmatpush.msra.mxu0 0.0
        %v1531 = vand.u32 %v543, 4294901760
        %1532 = vmatpush.msra.mxu0 %v1531
        %v1533 = vand.u32 %v1438, 4294901760
        %v1534 = vsub.f32 %v1438, %v1533
        %v1535 = vand.u32 %v1534, 4294901760
        %1536 = vmatmul.f32.gmra.mxu0 %v1535
        %v1537 = vpop.f32.mrf.mxu0
        %v1538 = vadd.f32 %v1514, %v1537
        %1539 = vdwg.mxu0
        %1540 = vmatpush.msra.mxu0 0.0
        %1541 = vmatpush.msra.mxu0 0.0
        %1542 = vmatpush.msra.mxu0 0.0
        %1543 = vmatpush.msra.mxu0 0.0
        %1544 = vmatpush.msra.mxu0 0.0
        %1545 = vmatpush.msra.mxu0 0.0
        %1546 = vmatpush.msra.mxu0 0.0
        %1547 = vmatpush.msra.mxu0 0.0
        %1548 = vmatpush.msra.mxu0 0.0
        %1549 = vmatpush.msra.mxu0 0.0
        %1550 = vmatpush.msra.mxu0 0.0
        %1551 = vmatpush.msra.mxu0 0.0
        %1552 = vmatpush.msra.mxu0 0.0
        %1553 = vmatpush.msra.mxu0 0.0
        %1554 = vmatpush.msra.mxu0 0.0
        %v1555 = vand.u32 %v543, 4294901760
        %v1556 = vsub.f32 %v543, %v1555
        %v1557 = vand.u32 %v1556, 4294901760
        %1558 = vmatpush.msra.mxu0 %v1557
        %v1559 = vand.u32 %v1438, 4294901760
        %1560 = vmatmul.f32.gmra.mxu0 %v1559
        %v1561 = vpop.f32.mrf.mxu0
        %v1562 = vadd.f32 %v1538, %v1561
        %1563 = vdwg.mxu0
        %1564 = vmatpush.msra.mxu0 0.0
        %1565 = vmatpush.msra.mxu0 0.0
        %1566 = vmatpush.msra.mxu0 0.0
        %1567 = vmatpush.msra.mxu0 0.0
        %1568 = vmatpush.msra.mxu0 0.0
        %1569 = vmatpush.msra.mxu0 0.0
        %1570 = vmatpush.msra.mxu0 0.0
        %1571 = vmatpush.msra.mxu0 0.0
        %1572 = vmatpush.msra.mxu0 0.0
        %1573 = vmatpush.msra.mxu0 0.0
        %1574 = vmatpush.msra.mxu0 0.0
        %1575 = vmatpush.msra.mxu0 0.0
        %1576 = vmatpush.msra.mxu0 0.0
        %1577 = vmatpush.msra.mxu0 0.0
        %1578 = vmatpush.msra.mxu0 0.0
        %v1579 = vand.u32 %v543, 4294901760
        %1580 = vmatpush.msra.mxu0 %v1579
        %v1581 = vand.u32 %v1438, 4294901760
        %1582 = vmatmul.f32.gmra.mxu0 %v1581
        %v1583 = vpop.f32.mrf.mxu0
        %v1584 = vadd.f32 %v1562, %v1583
        %1585 = vdwg.mxu0
        %1588 = vset.pattern.permute.xlu0 0
        %1589 = vperm.xlu0 %1588, %v652
        %v1590 = vpop.permute.xlu0 %1589
        %1591 = vset.pattern.permute.xlu0 0
        %1592 = vperm.xlu0 %1591, %v653
        %v1593 = vpop.permute.xlu0 %1592
        %v1594 = vperm.slane %v1590, %v1115
        %v1595 = vperm.slane %v1593, %v1115
        %v1596 = vsel %vm1118, %v1595, %v1594
        %v1597 = vsel %vm658, %v1596, 0
        %1599 = vmatpush.msra.mxu0 0.0
        %1600 = vmatpush.msra.mxu0 0.0
        %1601 = vmatpush.msra.mxu0 0.0
        %1602 = vmatpush.msra.mxu0 0.0
        %1603 = vmatpush.msra.mxu0 0.0
        %1604 = vmatpush.msra.mxu0 0.0
        %1605 = vmatpush.msra.mxu0 0.0
        %1606 = vmatpush.msra.mxu0 0.0
        %1607 = vmatpush.msra.mxu0 0.0
        %1608 = vmatpush.msra.mxu0 0.0
        %1609 = vmatpush.msra.mxu0 0.0
        %1610 = vmatpush.msra.mxu0 0.0
        %1611 = vmatpush.msra.mxu0 0.0
        %1612 = vmatpush.msra.mxu0 0.0
        %1613 = vmatpush.msra.mxu0 0.0
        %v1614 = vand.u32 %v541, 4294901760
        %1615 = vmatpush.msra.mxu0 %v1614
        %v1616 = vand.u32 %v1597, 4294901760
        %v1617 = vsub.f32 %v1597, %v1616
        %v1618 = vand.u32 %v1617, 4294901760
        %v1619 = vsub.f32 %v1617, %v1618
        %v1620 = vand.u32 %v1619, 4294901760
        %1621 = vmatmul.f32.gmra.mxu0 %v1620
        %v1622 = vpop.f32.mrf.mxu0
        %v1623 = vadd.f32 0.0, %v1622
        %1624 = vdwg.mxu0
        %1625 = vmatpush.msra.mxu0 0.0
        %1626 = vmatpush.msra.mxu0 0.0
        %1627 = vmatpush.msra.mxu0 0.0
        %1628 = vmatpush.msra.mxu0 0.0
        %1629 = vmatpush.msra.mxu0 0.0
        %1630 = vmatpush.msra.mxu0 0.0
        %1631 = vmatpush.msra.mxu0 0.0
        %1632 = vmatpush.msra.mxu0 0.0
        %1633 = vmatpush.msra.mxu0 0.0
        %1634 = vmatpush.msra.mxu0 0.0
        %1635 = vmatpush.msra.mxu0 0.0
        %1636 = vmatpush.msra.mxu0 0.0
        %1637 = vmatpush.msra.mxu0 0.0
        %1638 = vmatpush.msra.mxu0 0.0
        %1639 = vmatpush.msra.mxu0 0.0
        %v1640 = vand.u32 %v541, 4294901760
        %v1641 = vsub.f32 %v541, %v1640
        %v1642 = vand.u32 %v1641, 4294901760
        %v1643 = vsub.f32 %v1641, %v1642
        %v1644 = vand.u32 %v1643, 4294901760
        %1645 = vmatpush.msra.mxu0 %v1644
        %v1646 = vand.u32 %v1597, 4294901760
        %1647 = vmatmul.f32.gmra.mxu0 %v1646
        %v1648 = vpop.f32.mrf.mxu0
        %v1649 = vadd.f32 %v1623, %v1648
        %1650 = vdwg.mxu0
        %1651 = vmatpush.msra.mxu0 0.0
        %1652 = vmatpush.msra.mxu0 0.0
        %1653 = vmatpush.msra.mxu0 0.0
        %1654 = vmatpush.msra.mxu0 0.0
        %1655 = vmatpush.msra.mxu0 0.0
        %1656 = vmatpush.msra.mxu0 0.0
        %1657 = vmatpush.msra.mxu0 0.0
        %1658 = vmatpush.msra.mxu0 0.0
        %1659 = vmatpush.msra.mxu0 0.0
        %1660 = vmatpush.msra.mxu0 0.0
        %1661 = vmatpush.msra.mxu0 0.0
        %1662 = vmatpush.msra.mxu0 0.0
        %1663 = vmatpush.msra.mxu0 0.0
        %1664 = vmatpush.msra.mxu0 0.0
        %1665 = vmatpush.msra.mxu0 0.0
        %v1666 = vand.u32 %v541, 4294901760
        %v1667 = vsub.f32 %v541, %v1666
        %1668 = vmatpush.msra.mxu0 %v1667
        %v1669 = vand.u32 %v1597, 4294901760
        %v1670 = vsub.f32 %v1597, %v1669
        %1671 = vmatmul.f32.gmra.mxu0 %v1670
        %v1672 = vpop.f32.mrf.mxu0
        %v1673 = vadd.f32 %v1649, %v1672
        %1674 = vdwg.mxu0
        %1675 = vmatpush.msra.mxu0 0.0
        %1676 = vmatpush.msra.mxu0 0.0
        %1677 = vmatpush.msra.mxu0 0.0
        %1678 = vmatpush.msra.mxu0 0.0
        %1679 = vmatpush.msra.mxu0 0.0
        %1680 = vmatpush.msra.mxu0 0.0
        %1681 = vmatpush.msra.mxu0 0.0
        %1682 = vmatpush.msra.mxu0 0.0
        %1683 = vmatpush.msra.mxu0 0.0
        %1684 = vmatpush.msra.mxu0 0.0
        %1685 = vmatpush.msra.mxu0 0.0
        %1686 = vmatpush.msra.mxu0 0.0
        %1687 = vmatpush.msra.mxu0 0.0
        %1688 = vmatpush.msra.mxu0 0.0
        %1689 = vmatpush.msra.mxu0 0.0
        %v1690 = vand.u32 %v541, 4294901760
        %1691 = vmatpush.msra.mxu0 %v1690
        %v1692 = vand.u32 %v1597, 4294901760
        %v1693 = vsub.f32 %v1597, %v1692
        %v1694 = vand.u32 %v1693, 4294901760
        %1695 = vmatmul.f32.gmra.mxu0 %v1694
        %v1696 = vpop.f32.mrf.mxu0
        %v1697 = vadd.f32 %v1673, %v1696
        %1698 = vdwg.mxu0
        %1699 = vmatpush.msra.mxu0 0.0
        %1700 = vmatpush.msra.mxu0 0.0
        %1701 = vmatpush.msra.mxu0 0.0
        %1702 = vmatpush.msra.mxu0 0.0
        %1703 = vmatpush.msra.mxu0 0.0
        %1704 = vmatpush.msra.mxu0 0.0
        %1705 = vmatpush.msra.mxu0 0.0
        %1706 = vmatpush.msra.mxu0 0.0
        %1707 = vmatpush.msra.mxu0 0.0
        %1708 = vmatpush.msra.mxu0 0.0
        %1709 = vmatpush.msra.mxu0 0.0
        %1710 = vmatpush.msra.mxu0 0.0
        %1711 = vmatpush.msra.mxu0 0.0
        %1712 = vmatpush.msra.mxu0 0.0
        %1713 = vmatpush.msra.mxu0 0.0
        %v1714 = vand.u32 %v541, 4294901760
        %v1715 = vsub.f32 %v541, %v1714
        %v1716 = vand.u32 %v1715, 4294901760
        %1717 = vmatpush.msra.mxu0 %v1716
        %v1718 = vand.u32 %v1597, 4294901760
        %1719 = vmatmul.f32.gmra.mxu0 %v1718
        %v1720 = vpop.f32.mrf.mxu0
        %v1721 = vadd.f32 %v1697, %v1720
        %1722 = vdwg.mxu0
        %1723 = vmatpush.msra.mxu0 0.0
        %1724 = vmatpush.msra.mxu0 0.0
        %1725 = vmatpush.msra.mxu0 0.0
        %1726 = vmatpush.msra.mxu0 0.0
        %1727 = vmatpush.msra.mxu0 0.0
        %1728 = vmatpush.msra.mxu0 0.0
        %1729 = vmatpush.msra.mxu0 0.0
        %1730 = vmatpush.msra.mxu0 0.0
        %1731 = vmatpush.msra.mxu0 0.0
        %1732 = vmatpush.msra.mxu0 0.0
        %1733 = vmatpush.msra.mxu0 0.0
        %1734 = vmatpush.msra.mxu0 0.0
        %1735 = vmatpush.msra.mxu0 0.0
        %1736 = vmatpush.msra.mxu0 0.0
        %1737 = vmatpush.msra.mxu0 0.0
        %v1738 = vand.u32 %v541, 4294901760
        %1739 = vmatpush.msra.mxu0 %v1738
        %v1740 = vand.u32 %v1597, 4294901760
        %1741 = vmatmul.f32.gmra.mxu0 %v1740
        %v1742 = vpop.f32.mrf.mxu0
        %v1743 = vadd.f32 %v1721, %v1742
        %1744 = vdwg.mxu0
        %1747 = vset.pattern.permute.xlu0 0
        %1748 = vperm.xlu0 %1747, %v654
        %v1749 = vpop.permute.xlu0 %1748
        %1750 = vset.pattern.permute.xlu0 0
        %1751 = vperm.xlu0 %1750, %v655
        %v1752 = vpop.permute.xlu0 %1751
        %v1753 = vperm.slane %v1749, %v1115
        %v1754 = vperm.slane %v1752, %v1115
        %v1755 = vsel %vm1118, %v1754, %v1753
        %v1756 = vsel %vm658, %v1755, 0
        %1758 = vmatpush.msra.mxu0 0.0
        %1759 = vmatpush.msra.mxu0 0.0
        %1760 = vmatpush.msra.mxu0 0.0
        %1761 = vmatpush.msra.mxu0 0.0
        %1762 = vmatpush.msra.mxu0 0.0
        %1763 = vmatpush.msra.mxu0 0.0
        %1764 = vmatpush.msra.mxu0 0.0
        %1765 = vmatpush.msra.mxu0 0.0
        %1766 = vmatpush.msra.mxu0 0.0
        %1767 = vmatpush.msra.mxu0 0.0
        %1768 = vmatpush.msra.mxu0 0.0
        %1769 = vmatpush.msra.mxu0 0.0
        %1770 = vmatpush.msra.mxu0 0.0
        %1771 = vmatpush.msra.mxu0 0.0
        %1772 = vmatpush.msra.mxu0 0.0
        %v1773 = vand.u32 %v542, 4294901760
        %1774 = vmatpush.msra.mxu0 %v1773
        %v1775 = vand.u32 %v1756, 4294901760
        %v1776 = vsub.f32 %v1756, %v1775
        %v1777 = vand.u32 %v1776, 4294901760
        %v1778 = vsub.f32 %v1776, %v1777
        %v1779 = vand.u32 %v1778, 4294901760
        %1780 = vmatmul.f32.gmra.mxu0 %v1779
        %v1781 = vpop.f32.mrf.mxu0
        %v1782 = vadd.f32 0.0, %v1781
        %1783 = vdwg.mxu0
        %1784 = vmatpush.msra.mxu0 0.0
        %1785 = vmatpush.msra.mxu0 0.0
        %1786 = vmatpush.msra.mxu0 0.0
        %1787 = vmatpush.msra.mxu0 0.0
        %1788 = vmatpush.msra.mxu0 0.0
        %1789 = vmatpush.msra.mxu0 0.0
        %1790 = vmatpush.msra.mxu0 0.0
        %1791 = vmatpush.msra.mxu0 0.0
        %1792 = vmatpush.msra.mxu0 0.0
        %1793 = vmatpush.msra.mxu0 0.0
        %1794 = vmatpush.msra.mxu0 0.0
        %1795 = vmatpush.msra.mxu0 0.0
        %1796 = vmatpush.msra.mxu0 0.0
        %1797 = vmatpush.msra.mxu0 0.0
        %1798 = vmatpush.msra.mxu0 0.0
        %v1799 = vand.u32 %v542, 4294901760
        %v1800 = vsub.f32 %v542, %v1799
        %v1801 = vand.u32 %v1800, 4294901760
        %v1802 = vsub.f32 %v1800, %v1801
        %v1803 = vand.u32 %v1802, 4294901760
        %1804 = vmatpush.msra.mxu0 %v1803
        %v1805 = vand.u32 %v1756, 4294901760
        %1806 = vmatmul.f32.gmra.mxu0 %v1805
        %v1807 = vpop.f32.mrf.mxu0
        %v1808 = vadd.f32 %v1782, %v1807
        %1809 = vdwg.mxu0
        %1810 = vmatpush.msra.mxu0 0.0
        %1811 = vmatpush.msra.mxu0 0.0
        %1812 = vmatpush.msra.mxu0 0.0
        %1813 = vmatpush.msra.mxu0 0.0
        %1814 = vmatpush.msra.mxu0 0.0
        %1815 = vmatpush.msra.mxu0 0.0
        %1816 = vmatpush.msra.mxu0 0.0
        %1817 = vmatpush.msra.mxu0 0.0
        %1818 = vmatpush.msra.mxu0 0.0
        %1819 = vmatpush.msra.mxu0 0.0
        %1820 = vmatpush.msra.mxu0 0.0
        %1821 = vmatpush.msra.mxu0 0.0
        %1822 = vmatpush.msra.mxu0 0.0
        %1823 = vmatpush.msra.mxu0 0.0
        %1824 = vmatpush.msra.mxu0 0.0
        %v1825 = vand.u32 %v542, 4294901760
        %v1826 = vsub.f32 %v542, %v1825
        %1827 = vmatpush.msra.mxu0 %v1826
        %v1828 = vand.u32 %v1756, 4294901760
        %v1829 = vsub.f32 %v1756, %v1828
        %1830 = vmatmul.f32.gmra.mxu0 %v1829
        %v1831 = vpop.f32.mrf.mxu0
        %v1832 = vadd.f32 %v1808, %v1831
        %1833 = vdwg.mxu0
        %1834 = vmatpush.msra.mxu0 0.0
        %1835 = vmatpush.msra.mxu0 0.0
        %1836 = vmatpush.msra.mxu0 0.0
        %1837 = vmatpush.msra.mxu0 0.0
        %1838 = vmatpush.msra.mxu0 0.0
        %1839 = vmatpush.msra.mxu0 0.0
        %1840 = vmatpush.msra.mxu0 0.0
        %1841 = vmatpush.msra.mxu0 0.0
        %1842 = vmatpush.msra.mxu0 0.0
        %1843 = vmatpush.msra.mxu0 0.0
        %1844 = vmatpush.msra.mxu0 0.0
        %1845 = vmatpush.msra.mxu0 0.0
        %1846 = vmatpush.msra.mxu0 0.0
        %1847 = vmatpush.msra.mxu0 0.0
        %1848 = vmatpush.msra.mxu0 0.0
        %v1849 = vand.u32 %v542, 4294901760
        %1850 = vmatpush.msra.mxu0 %v1849
        %v1851 = vand.u32 %v1756, 4294901760
        %v1852 = vsub.f32 %v1756, %v1851
        %v1853 = vand.u32 %v1852, 4294901760
        %1854 = vmatmul.f32.gmra.mxu0 %v1853
        %v1855 = vpop.f32.mrf.mxu0
        %v1856 = vadd.f32 %v1832, %v1855
        %1857 = vdwg.mxu0
        %1858 = vmatpush.msra.mxu0 0.0
        %1859 = vmatpush.msra.mxu0 0.0
        %1860 = vmatpush.msra.mxu0 0.0
        %1861 = vmatpush.msra.mxu0 0.0
        %1862 = vmatpush.msra.mxu0 0.0
        %1863 = vmatpush.msra.mxu0 0.0
        %1864 = vmatpush.msra.mxu0 0.0
        %1865 = vmatpush.msra.mxu0 0.0
        %1866 = vmatpush.msra.mxu0 0.0
        %1867 = vmatpush.msra.mxu0 0.0
        %1868 = vmatpush.msra.mxu0 0.0
        %1869 = vmatpush.msra.mxu0 0.0
        %1870 = vmatpush.msra.mxu0 0.0
        %1871 = vmatpush.msra.mxu0 0.0
        %1872 = vmatpush.msra.mxu0 0.0
        %v1873 = vand.u32 %v542, 4294901760
        %v1874 = vsub.f32 %v542, %v1873
        %v1875 = vand.u32 %v1874, 4294901760
        %1876 = vmatpush.msra.mxu0 %v1875
        %v1877 = vand.u32 %v1756, 4294901760
        %1878 = vmatmul.f32.gmra.mxu0 %v1877
        %v1879 = vpop.f32.mrf.mxu0
        %v1880 = vadd.f32 %v1856, %v1879
        %1881 = vdwg.mxu0
        %1882 = vmatpush.msra.mxu0 0.0
        %1883 = vmatpush.msra.mxu0 0.0
        %1884 = vmatpush.msra.mxu0 0.0
        %1885 = vmatpush.msra.mxu0 0.0
        %1886 = vmatpush.msra.mxu0 0.0
        %1887 = vmatpush.msra.mxu0 0.0
        %1888 = vmatpush.msra.mxu0 0.0
        %1889 = vmatpush.msra.mxu0 0.0
        %1890 = vmatpush.msra.mxu0 0.0
        %1891 = vmatpush.msra.mxu0 0.0
        %1892 = vmatpush.msra.mxu0 0.0
        %1893 = vmatpush.msra.mxu0 0.0
        %1894 = vmatpush.msra.mxu0 0.0
        %1895 = vmatpush.msra.mxu0 0.0
        %1896 = vmatpush.msra.mxu0 0.0
        %v1897 = vand.u32 %v542, 4294901760
        %1898 = vmatpush.msra.mxu0 %v1897
        %v1899 = vand.u32 %v1756, 4294901760
        %1900 = vmatmul.f32.gmra.mxu0 %v1899
        %v1901 = vpop.f32.mrf.mxu0
        %v1902 = vadd.f32 %v1880, %v1901
        %1903 = vdwg.mxu0
        %1906 = vset.pattern.permute.xlu0 0
        %1907 = vperm.xlu0 %1906, %v656
        %v1908 = vpop.permute.xlu0 %1907
        %1909 = vset.pattern.permute.xlu0 0
        %1910 = vperm.xlu0 %1909, %v657
        %v1911 = vpop.permute.xlu0 %1910
        %v1912 = vperm.slane %v1908, %v1115
        %v1913 = vperm.slane %v1911, %v1115
        %v1914 = vsel %vm1118, %v1913, %v1912
        %v1915 = vsel %vm658, %v1914, 0
        %1917 = vmatpush.msra.mxu0 0.0
        %1918 = vmatpush.msra.mxu0 0.0
        %1919 = vmatpush.msra.mxu0 0.0
        %1920 = vmatpush.msra.mxu0 0.0
        %1921 = vmatpush.msra.mxu0 0.0
        %1922 = vmatpush.msra.mxu0 0.0
        %1923 = vmatpush.msra.mxu0 0.0
        %1924 = vmatpush.msra.mxu0 0.0
        %1925 = vmatpush.msra.mxu0 0.0
        %1926 = vmatpush.msra.mxu0 0.0
        %1927 = vmatpush.msra.mxu0 0.0
        %1928 = vmatpush.msra.mxu0 0.0
        %1929 = vmatpush.msra.mxu0 0.0
        %1930 = vmatpush.msra.mxu0 0.0
        %1931 = vmatpush.msra.mxu0 0.0
        %v1932 = vand.u32 %v543, 4294901760
        %1933 = vmatpush.msra.mxu0 %v1932
        %v1934 = vand.u32 %v1915, 4294901760
        %v1935 = vsub.f32 %v1915, %v1934
        %v1936 = vand.u32 %v1935, 4294901760
        %v1937 = vsub.f32 %v1935, %v1936
        %v1938 = vand.u32 %v1937, 4294901760
        %1939 = vmatmul.f32.gmra.mxu0 %v1938
        %v1940 = vpop.f32.mrf.mxu0
        %v1941 = vadd.f32 0.0, %v1940
        %1942 = vdwg.mxu0
        %1943 = vmatpush.msra.mxu0 0.0
        %1944 = vmatpush.msra.mxu0 0.0
        %1945 = vmatpush.msra.mxu0 0.0
        %1946 = vmatpush.msra.mxu0 0.0
        %1947 = vmatpush.msra.mxu0 0.0
        %1948 = vmatpush.msra.mxu0 0.0
        %1949 = vmatpush.msra.mxu0 0.0
        %1950 = vmatpush.msra.mxu0 0.0
        %1951 = vmatpush.msra.mxu0 0.0
        %1952 = vmatpush.msra.mxu0 0.0
        %1953 = vmatpush.msra.mxu0 0.0
        %1954 = vmatpush.msra.mxu0 0.0
        %1955 = vmatpush.msra.mxu0 0.0
        %1956 = vmatpush.msra.mxu0 0.0
        %1957 = vmatpush.msra.mxu0 0.0
        %v1958 = vand.u32 %v543, 4294901760
        %v1959 = vsub.f32 %v543, %v1958
        %v1960 = vand.u32 %v1959, 4294901760
        %v1961 = vsub.f32 %v1959, %v1960
        %v1962 = vand.u32 %v1961, 4294901760
        %1963 = vmatpush.msra.mxu0 %v1962
        %v1964 = vand.u32 %v1915, 4294901760
        %1965 = vmatmul.f32.gmra.mxu0 %v1964
        %v1966 = vpop.f32.mrf.mxu0
        %v1967 = vadd.f32 %v1941, %v1966
        %1968 = vdwg.mxu0
        %1969 = vmatpush.msra.mxu0 0.0
        %1970 = vmatpush.msra.mxu0 0.0
        %1971 = vmatpush.msra.mxu0 0.0
        %1972 = vmatpush.msra.mxu0 0.0
        %1973 = vmatpush.msra.mxu0 0.0
        %1974 = vmatpush.msra.mxu0 0.0
        %1975 = vmatpush.msra.mxu0 0.0
        %1976 = vmatpush.msra.mxu0 0.0
        %1977 = vmatpush.msra.mxu0 0.0
        %1978 = vmatpush.msra.mxu0 0.0
        %1979 = vmatpush.msra.mxu0 0.0
        %1980 = vmatpush.msra.mxu0 0.0
        %1981 = vmatpush.msra.mxu0 0.0
        %1982 = vmatpush.msra.mxu0 0.0
        %1983 = vmatpush.msra.mxu0 0.0
        %v1984 = vand.u32 %v543, 4294901760
        %v1985 = vsub.f32 %v543, %v1984
        %1986 = vmatpush.msra.mxu0 %v1985
        %v1987 = vand.u32 %v1915, 4294901760
        %v1988 = vsub.f32 %v1915, %v1987
        %1989 = vmatmul.f32.gmra.mxu0 %v1988
        %v1990 = vpop.f32.mrf.mxu0
        %v1991 = vadd.f32 %v1967, %v1990
        %1992 = vdwg.mxu0
        %1993 = vmatpush.msra.mxu0 0.0
        %1994 = vmatpush.msra.mxu0 0.0
        %1995 = vmatpush.msra.mxu0 0.0
        %1996 = vmatpush.msra.mxu0 0.0
        %1997 = vmatpush.msra.mxu0 0.0
        %1998 = vmatpush.msra.mxu0 0.0
        %1999 = vmatpush.msra.mxu0 0.0
        %2000 = vmatpush.msra.mxu0 0.0
        %2001 = vmatpush.msra.mxu0 0.0
        %2002 = vmatpush.msra.mxu0 0.0
        %2003 = vmatpush.msra.mxu0 0.0
        %2004 = vmatpush.msra.mxu0 0.0
        %2005 = vmatpush.msra.mxu0 0.0
        %2006 = vmatpush.msra.mxu0 0.0
        %2007 = vmatpush.msra.mxu0 0.0
        %v2008 = vand.u32 %v543, 4294901760
        %2009 = vmatpush.msra.mxu0 %v2008
        %v2010 = vand.u32 %v1915, 4294901760
        %v2011 = vsub.f32 %v1915, %v2010
        %v2012 = vand.u32 %v2011, 4294901760
        %2013 = vmatmul.f32.gmra.mxu0 %v2012
        %v2014 = vpop.f32.mrf.mxu0
        %v2015 = vadd.f32 %v1991, %v2014
        %2016 = vdwg.mxu0
        %2017 = vmatpush.msra.mxu0 0.0
        %2018 = vmatpush.msra.mxu0 0.0
        %2019 = vmatpush.msra.mxu0 0.0
        %2020 = vmatpush.msra.mxu0 0.0
        %2021 = vmatpush.msra.mxu0 0.0
        %2022 = vmatpush.msra.mxu0 0.0
        %2023 = vmatpush.msra.mxu0 0.0
        %2024 = vmatpush.msra.mxu0 0.0
        %2025 = vmatpush.msra.mxu0 0.0
        %2026 = vmatpush.msra.mxu0 0.0
        %2027 = vmatpush.msra.mxu0 0.0
        %2028 = vmatpush.msra.mxu0 0.0
        %2029 = vmatpush.msra.mxu0 0.0
        %2030 = vmatpush.msra.mxu0 0.0
        %2031 = vmatpush.msra.mxu0 0.0
        %v2032 = vand.u32 %v543, 4294901760
        %v2033 = vsub.f32 %v543, %v2032
        %v2034 = vand.u32 %v2033, 4294901760
        %2035 = vmatpush.msra.mxu0 %v2034
        %v2036 = vand.u32 %v1915, 4294901760
        %2037 = vmatmul.f32.gmra.mxu0 %v2036
        %v2038 = vpop.f32.mrf.mxu0
        %v2039 = vadd.f32 %v2015, %v2038
        %2040 = vdwg.mxu0
        %2041 = vmatpush.msra.mxu0 0.0
        %2042 = vmatpush.msra.mxu0 0.0
        %2043 = vmatpush.msra.mxu0 0.0
        %2044 = vmatpush.msra.mxu0 0.0
        %2045 = vmatpush.msra.mxu0 0.0
        %2046 = vmatpush.msra.mxu0 0.0
        %2047 = vmatpush.msra.mxu0 0.0
        %2048 = vmatpush.msra.mxu0 0.0
        %2049 = vmatpush.msra.mxu0 0.0
        %2050 = vmatpush.msra.mxu0 0.0
        %2051 = vmatpush.msra.mxu0 0.0
        %2052 = vmatpush.msra.mxu0 0.0
        %2053 = vmatpush.msra.mxu0 0.0
        %2054 = vmatpush.msra.mxu0 0.0
        %2055 = vmatpush.msra.mxu0 0.0
        %v2056 = vand.u32 %v543, 4294901760
        %2057 = vmatpush.msra.mxu0 %v2056
        %v2058 = vand.u32 %v1915, 4294901760
        %2059 = vmatmul.f32.gmra.mxu0 %v2058
        %v2060 = vpop.f32.mrf.mxu0
        %v2061 = vadd.f32 %v2039, %v2060
        %2062 = vdwg.mxu0
        %vm2063 = vcmp.gt.f32.partialorder %v544, 0.0
        %vm2064 = vcmp.gt.f32.partialorder %v545, 0.0
        %vm2065 = vcmp.gt.f32.partialorder %v546, 0.0
        %v2066 = vsel %vm2063, 1, 0
        %v2067 = vsel %vm2064, 1, 0
        %v2068 = vsel %vm2065, 1, 0
        %v2069 = vperm.slane %v2066, 0
        %v2070 = vperm.slane %v2067, 0
        %v2071 = vperm.slane %v2068, 0
        %vm2072 = vcmp.eq.s32.totalorder %v2069, 1
        %vm2073 = vcmp.eq.s32.totalorder %v2070, 1
        %vm2074 = vcmp.eq.s32.totalorder %v2071, 1
        %v2075 = vsel %vm2072, %v806, -inf
        %v2076 = vsel %vm2073, %v955, -inf
        %v2077 = vsel %vm2074, %v1104, -inf
        %v2081 = vperm.slane %v547, 0
        %v2082 = vperm.slane %v548, 0
        %v2083 = vperm.slane %v549, 0
        %v2087 = vsel %vm2072, %v1743, %v2081
        %v2088 = vsel %vm2073, %v1902, %v2082
        %v2089 = vsel %vm2074, %v2061, %v2083
        %v2090 = vcvt.s32.f32 %v2066
        %v2091 = vcvt.s32.f32 %v2067
        %v2092 = vcvt.s32.f32 %v2068
        %vm2093 = vcmask 122880
        %v2094 = vsel %vm2093, %v2090, 0.0
        %2095 = vadd.xlane.f32.xlu0 %v2094
        %v2096 = vpop.xlane.xlu0 %2095
        %v2097 = vsel %vm2093, %v2091, 0.0
        %2098 = vadd.xlane.f32.xlu0 %v2097
        %v2099 = vpop.xlane.xlu0 %2098
        %v2100 = vsel %vm2093, %v2092, 0.0
        %2101 = vadd.xlane.f32.xlu0 %v2100
        %v2102 = vpop.xlane.xlu0 %2101
        %v2103 = vrcp.pop %v2096
        %v2104 = vmul.f32 %v2096, %v2103
        %v2105 = vsub.f32 1.0, %v2104
        %v2106 = vmul.f32 %v2103, %v2105
        %v2107 = vadd.f32 %v2103, %v2106
        %vm2108 = vweird.f32 %v2096
        %vm2109 = vweird.f32 %v2103
        %vm2110 = vmor %vm2108, %vm2109
        %v2111 = vsel %vm2110, %v2103, %v2107
        %v2112 = vand.u32 2147483647, %v2096
        %vm2113 = vcmp.eq.f32.partialorder %v2112, 8.507059e+37
        %v2114 = vand.u32 %v2096, 2147483648
        %v2115 = vor.u32 1.1754944e-38, %v2114
        %v2116 = vsel %vm2113, %v2115, %v2111
        %v2117 = vmul.f32 %v2090, %v2116
        %v2118 = vrcp.pop %v2099
        %v2119 = vmul.f32 %v2099, %v2118
        %v2120 = vsub.f32 1.0, %v2119
        %v2121 = vmul.f32 %v2118, %v2120
        %v2122 = vadd.f32 %v2118, %v2121
        %vm2123 = vweird.f32 %v2099
        %vm2124 = vweird.f32 %v2118
        %vm2125 = vmor %vm2123, %vm2124
        %v2126 = vsel %vm2125, %v2118, %v2122
        %v2127 = vand.u32 2147483647, %v2099
        %vm2128 = vcmp.eq.f32.partialorder %v2127, 8.507059e+37
        %v2129 = vand.u32 %v2099, 2147483648
        %v2130 = vor.u32 1.1754944e-38, %v2129
        %v2131 = vsel %vm2128, %v2130, %v2126
        %v2132 = vmul.f32 %v2091, %v2131
        %v2133 = vrcp.pop %v2102
        %v2134 = vmul.f32 %v2102, %v2133
        %v2135 = vsub.f32 1.0, %v2134
        %v2136 = vmul.f32 %v2133, %v2135
        %v2137 = vadd.f32 %v2133, %v2136
        %vm2138 = vweird.f32 %v2102
        %vm2139 = vweird.f32 %v2133
        %vm2140 = vmor %vm2138, %vm2139
        %v2141 = vsel %vm2140, %v2133, %v2137
        %v2142 = vand.u32 2147483647, %v2102
        %vm2143 = vcmp.eq.f32.partialorder %v2142, 8.507059e+37
        %v2144 = vand.u32 %v2102, 2147483648
        %v2145 = vor.u32 1.1754944e-38, %v2144
        %v2146 = vsel %vm2143, %v2145, %v2141
        %v2147 = vmul.f32 %v2092, %v2146
        %v2151 = vperm.slane %v2117, 0
        %v2152 = vperm.slane %v2132, 0
        %v2153 = vperm.slane %v2147, 0
        %v2158 = vperm.slane %v552, 0
        %v2160 = vsub.f32 %v2075, %v2158
        %v2161 = vsub.f32 %v2076, %v2158
        %v2162 = vsub.f32 %v2077, %v2158
        %vm2163 = vcmask 123904
        %v2164 = vsel %vm2163, %v2160, -inf
        %2165 = vmax.xlane.f32.xlu0 %v2164
        %v2166 = vpop.xlane.xlu0 %2165
        %v2167 = vsel %vm2163, %v2161, -inf
        %2168 = vmax.xlane.f32.xlu0 %v2167
        %v2169 = vpop.xlane.xlu0 %2168
        %v2170 = vsel %vm2163, %v2162, -inf
        %2171 = vmax.xlane.f32.xlu0 %v2170
        %v2172 = vpop.xlane.xlu0 %2171
        %v2173 = vsub.f32 %v2160, %v2166
        %v2174 = vsub.f32 %v2161, %v2169
        %v2175 = vsub.f32 %v2162, %v2172
        %v2176 = vmul.f32 %v2173, 1.442695
        %v2177 = vpow.pop %v2176
        %v2178 = vmul.f32 %v2174, 1.442695
        %v2179 = vpow.pop %v2178
        %v2180 = vmul.f32 %v2175, 1.442695
        %v2181 = vpow.pop %v2180
        %v2182 = vsel %vm2072, %v2177, 0.0
        %v2183 = vsel %vm2073, %v2179, 0.0
        %v2184 = vsel %vm2074, %v2181, 0.0
        %v2185 = vsel %vm2163, %v2182, 0.0
        %2186 = vadd.xlane.f32.xlu0 %v2185
        %v2187 = vpop.xlane.xlu0 %2186
        %v2188 = vsel %vm2163, %v2183, 0.0
        %2189 = vadd.xlane.f32.xlu0 %v2188
        %v2190 = vpop.xlane.xlu0 %2189
        %v2191 = vsel %vm2163, %v2184, 0.0
        %2192 = vadd.xlane.f32.xlu0 %v2191
        %v2193 = vpop.xlane.xlu0 %2192
        %v2194 = vrcp.pop %v2187
        %v2195 = vmul.f32 %v2187, %v2194
        %v2196 = vsub.f32 1.0, %v2195
        %v2197 = vmul.f32 %v2194, %v2196
        %v2198 = vadd.f32 %v2194, %v2197
        %vm2199 = vweird.f32 %v2187
        %vm2200 = vweird.f32 %v2194
        %vm2201 = vmor %vm2199, %vm2200
        %v2202 = vsel %vm2201, %v2194, %v2198
        %v2203 = vand.u32 2147483647, %v2187
        %vm2204 = vcmp.eq.f32.partialorder %v2203, 8.507059e+37
        %v2205 = vand.u32 %v2187, 2147483648
        %v2206 = vor.u32 1.1754944e-38, %v2205
        %v2207 = vsel %vm2204, %v2206, %v2202
        %v2208 = vmul.f32 %v2182, %v2207
        %v2209 = vrcp.pop %v2190
        %v2210 = vmul.f32 %v2190, %v2209
        %v2211 = vsub.f32 1.0, %v2210
        %v2212 = vmul.f32 %v2209, %v2211
        %v2213 = vadd.f32 %v2209, %v2212
        %vm2214 = vweird.f32 %v2190
        %vm2215 = vweird.f32 %v2209
        %vm2216 = vmor %vm2214, %vm2215
        %v2217 = vsel %vm2216, %v2209, %v2213
        %v2218 = vand.u32 2147483647, %v2190
        %vm2219 = vcmp.eq.f32.partialorder %v2218, 8.507059e+37
        %v2220 = vand.u32 %v2190, 2147483648
        %v2221 = vor.u32 1.1754944e-38, %v2220
        %v2222 = vsel %vm2219, %v2221, %v2217
        %v2223 = vmul.f32 %v2183, %v2222
        %v2224 = vrcp.pop %v2193
        %v2225 = vmul.f32 %v2193, %v2224
        %v2226 = vsub.f32 1.0, %v2225
        %v2227 = vmul.f32 %v2224, %v2226
        %v2228 = vadd.f32 %v2224, %v2227
        %vm2229 = vweird.f32 %v2193
        %vm2230 = vweird.f32 %v2224
        %vm2231 = vmor %vm2229, %vm2230
        %v2232 = vsel %vm2231, %v2224, %v2228
        %v2233 = vand.u32 2147483647, %v2193
        %vm2234 = vcmp.eq.f32.partialorder %v2233, 8.507059e+37
        %v2235 = vand.u32 %v2193, 2147483648
        %v2236 = vor.u32 1.1754944e-38, %v2235
        %v2237 = vsel %vm2234, %v2236, %v2232
        %v2238 = vmul.f32 %v2184, %v2237
        %vm2239 = vcmask 130048
        %v2241 = vsel %vm2239, %v2208, 0
        %2243 = vmatpush.msra.mxu0 0.0
        %2244 = vmatpush.msra.mxu0 0.0
        %2245 = vmatpush.msra.mxu0 0.0
        %2246 = vmatpush.msra.mxu0 0.0
        %2247 = vmatpush.msra.mxu0 0.0
        %2248 = vmatpush.msra.mxu0 0.0
        %2249 = vmatpush.msra.mxu0 0.0
        %2250 = vmatpush.msra.mxu0 0.0
        %2251 = vmatpush.msra.mxu0 0.0
        %2252 = vmatpush.msra.mxu0 0.0
        %2253 = vmatpush.msra.mxu0 0.0
        %2254 = vmatpush.msra.mxu0 0.0
        %2255 = vmatpush.msra.mxu0 0.0
        %2256 = vmatpush.msra.mxu0 0.0
        %v2257 = vand.u32 %v551, 4294901760
        %2258 = vmatpush.msra.mxu0 %v2257
        %v2259 = vand.u32 %v550, 4294901760
        %2260 = vmatpush.msra.mxu0 %v2259
        %v2261 = vand.u32 %v2241, 4294901760
        %v2262 = vsub.f32 %v2241, %v2261
        %v2263 = vand.u32 %v2262, 4294901760
        %v2264 = vsub.f32 %v2262, %v2263
        %v2265 = vand.u32 %v2264, 4294901760
        %2266 = vmatmul.f32.gmra.mxu0 %v2265
        %v2267 = vpop.f32.mrf.mxu0
        %v2268 = vadd.f32 0.0, %v2267
        %2269 = vdwg.mxu0
        %2270 = vmatpush.msra.mxu0 0.0
        %2271 = vmatpush.msra.mxu0 0.0
        %2272 = vmatpush.msra.mxu0 0.0
        %2273 = vmatpush.msra.mxu0 0.0
        %2274 = vmatpush.msra.mxu0 0.0
        %2275 = vmatpush.msra.mxu0 0.0
        %2276 = vmatpush.msra.mxu0 0.0
        %2277 = vmatpush.msra.mxu0 0.0
        %2278 = vmatpush.msra.mxu0 0.0
        %2279 = vmatpush.msra.mxu0 0.0
        %2280 = vmatpush.msra.mxu0 0.0
        %2281 = vmatpush.msra.mxu0 0.0
        %2282 = vmatpush.msra.mxu0 0.0
        %2283 = vmatpush.msra.mxu0 0.0
        %v2284 = vand.u32 %v551, 4294901760
        %v2285 = vsub.f32 %v551, %v2284
        %v2286 = vand.u32 %v2285, 4294901760
        %v2287 = vsub.f32 %v2285, %v2286
        %v2288 = vand.u32 %v2287, 4294901760
        %2289 = vmatpush.msra.mxu0 %v2288
        %v2290 = vand.u32 %v550, 4294901760
        %v2291 = vsub.f32 %v550, %v2290
        %v2292 = vand.u32 %v2291, 4294901760
        %v2293 = vsub.f32 %v2291, %v2292
        %v2294 = vand.u32 %v2293, 4294901760
        %2295 = vmatpush.msra.mxu0 %v2294
        %v2296 = vand.u32 %v2241, 4294901760
        %2297 = vmatmul.f32.gmra.mxu0 %v2296
        %v2298 = vpop.f32.mrf.mxu0
        %v2299 = vadd.f32 %v2268, %v2298
        %2300 = vdwg.mxu0
        %2301 = vmatpush.msra.mxu0 0.0
        %2302 = vmatpush.msra.mxu0 0.0
        %2303 = vmatpush.msra.mxu0 0.0
        %2304 = vmatpush.msra.mxu0 0.0
        %2305 = vmatpush.msra.mxu0 0.0
        %2306 = vmatpush.msra.mxu0 0.0
        %2307 = vmatpush.msra.mxu0 0.0
        %2308 = vmatpush.msra.mxu0 0.0
        %2309 = vmatpush.msra.mxu0 0.0
        %2310 = vmatpush.msra.mxu0 0.0
        %2311 = vmatpush.msra.mxu0 0.0
        %2312 = vmatpush.msra.mxu0 0.0
        %2313 = vmatpush.msra.mxu0 0.0
        %2314 = vmatpush.msra.mxu0 0.0
        %v2315 = vand.u32 %v551, 4294901760
        %v2316 = vsub.f32 %v551, %v2315
        %2317 = vmatpush.msra.mxu0 %v2316
        %v2318 = vand.u32 %v550, 4294901760
        %v2319 = vsub.f32 %v550, %v2318
        %2320 = vmatpush.msra.mxu0 %v2319
        %v2321 = vand.u32 %v2241, 4294901760
        %v2322 = vsub.f32 %v2241, %v2321
        %2323 = vmatmul.f32.gmra.mxu0 %v2322
        %v2324 = vpop.f32.mrf.mxu0
        %v2325 = vadd.f32 %v2299, %v2324
        %2326 = vdwg.mxu0
        %2327 = vmatpush.msra.mxu0 0.0
        %2328 = vmatpush.msra.mxu0 0.0
        %2329 = vmatpush.msra.mxu0 0.0
        %2330 = vmatpush.msra.mxu0 0.0
        %2331 = vmatpush.msra.mxu0 0.0
        %2332 = vmatpush.msra.mxu0 0.0
        %2333 = vmatpush.msra.mxu0 0.0
        %2334 = vmatpush.msra.mxu0 0.0
        %2335 = vmatpush.msra.mxu0 0.0
        %2336 = vmatpush.msra.mxu0 0.0
        %2337 = vmatpush.msra.mxu0 0.0
        %2338 = vmatpush.msra.mxu0 0.0
        %2339 = vmatpush.msra.mxu0 0.0
        %2340 = vmatpush.msra.mxu0 0.0
        %v2341 = vand.u32 %v551, 4294901760
        %2342 = vmatpush.msra.mxu0 %v2341
        %v2343 = vand.u32 %v550, 4294901760
        %2344 = vmatpush.msra.mxu0 %v2343
        %v2345 = vand.u32 %v2241, 4294901760
        %v2346 = vsub.f32 %v2241, %v2345
        %v2347 = vand.u32 %v2346, 4294901760
        %2348 = vmatmul.f32.gmra.mxu0 %v2347
        %v2349 = vpop.f32.mrf.mxu0
        %v2350 = vadd.f32 %v2325, %v2349
        %2351 = vdwg.mxu0
        %2352 = vmatpush.msra.mxu0 0.0
        %2353 = vmatpush.msra.mxu0 0.0
        %2354 = vmatpush.msra.mxu0 0.0
        %2355 = vmatpush.msra.mxu0 0.0
        %2356 = vmatpush.msra.mxu0 0.0
        %2357 = vmatpush.msra.mxu0 0.0
        %2358 = vmatpush.msra.mxu0 0.0
        %2359 = vmatpush.msra.mxu0 0.0
        %2360 = vmatpush.msra.mxu0 0.0
        %2361 = vmatpush.msra.mxu0 0.0
        %2362 = vmatpush.msra.mxu0 0.0
        %2363 = vmatpush.msra.mxu0 0.0
        %2364 = vmatpush.msra.mxu0 0.0
        %2365 = vmatpush.msra.mxu0 0.0
        %v2366 = vand.u32 %v551, 4294901760
        %v2367 = vsub.f32 %v551, %v2366
        %v2368 = vand.u32 %v2367, 4294901760
        %2369 = vmatpush.msra.mxu0 %v2368
        %v2370 = vand.u32 %v550, 4294901760
        %v2371 = vsub.f32 %v550, %v2370
        %v2372 = vand.u32 %v2371, 4294901760
        %2373 = vmatpush.msra.mxu0 %v2372
        %v2374 = vand.u32 %v2241, 4294901760
        %2375 = vmatmul.f32.gmra.mxu0 %v2374
        %v2376 = vpop.f32.mrf.mxu0
        %v2377 = vadd.f32 %v2350, %v2376
        %2378 = vdwg.mxu0
        %2379 = vmatpush.msra.mxu0 0.0
        %2380 = vmatpush.msra.mxu0 0.0
        %2381 = vmatpush.msra.mxu0 0.0
        %2382 = vmatpush.msra.mxu0 0.0
        %2383 = vmatpush.msra.mxu0 0.0
        %2384 = vmatpush.msra.mxu0 0.0
        %2385 = vmatpush.msra.mxu0 0.0
        %2386 = vmatpush.msra.mxu0 0.0
        %2387 = vmatpush.msra.mxu0 0.0
        %2388 = vmatpush.msra.mxu0 0.0
        %2389 = vmatpush.msra.mxu0 0.0
        %2390 = vmatpush.msra.mxu0 0.0
        %2391 = vmatpush.msra.mxu0 0.0
        %2392 = vmatpush.msra.mxu0 0.0
        %v2393 = vand.u32 %v551, 4294901760
        %2394 = vmatpush.msra.mxu0 %v2393
        %v2395 = vand.u32 %v550, 4294901760
        %2396 = vmatpush.msra.mxu0 %v2395
        %v2397 = vand.u32 %v2241, 4294901760
        %2398 = vmatmul.f32.gmra.mxu0 %v2397
        %v2399 = vpop.f32.mrf.mxu0
        %v2400 = vadd.f32 %v2377, %v2399
        %2401 = vdwg.mxu0
        %v2403 = vsel %vm2239, %v2223, 0
        %2405 = vmatpush.msra.mxu0 0.0
        %2406 = vmatpush.msra.mxu0 0.0
        %2407 = vmatpush.msra.mxu0 0.0
        %2408 = vmatpush.msra.mxu0 0.0
        %2409 = vmatpush.msra.mxu0 0.0
        %2410 = vmatpush.msra.mxu0 0.0
        %2411 = vmatpush.msra.mxu0 0.0
        %2412 = vmatpush.msra.mxu0 0.0
        %2413 = vmatpush.msra.mxu0 0.0
        %2414 = vmatpush.msra.mxu0 0.0
        %2415 = vmatpush.msra.mxu0 0.0
        %2416 = vmatpush.msra.mxu0 0.0
        %2417 = vmatpush.msra.mxu0 0.0
        %2418 = vmatpush.msra.mxu0 0.0
        %v2419 = vand.u32 %v551, 4294901760
        %2420 = vmatpush.msra.mxu0 %v2419
        %v2421 = vand.u32 %v550, 4294901760
        %2422 = vmatpush.msra.mxu0 %v2421
        %v2423 = vand.u32 %v2403, 4294901760
        %v2424 = vsub.f32 %v2403, %v2423
        %v2425 = vand.u32 %v2424, 4294901760
        %v2426 = vsub.f32 %v2424, %v2425
        %v2427 = vand.u32 %v2426, 4294901760
        %2428 = vmatmul.f32.gmra.mxu0 %v2427
        %v2429 = vpop.f32.mrf.mxu0
        %v2430 = vadd.f32 0.0, %v2429
        %2431 = vdwg.mxu0
        %2432 = vmatpush.msra.mxu0 0.0
        %2433 = vmatpush.msra.mxu0 0.0
        %2434 = vmatpush.msra.mxu0 0.0
        %2435 = vmatpush.msra.mxu0 0.0
        %2436 = vmatpush.msra.mxu0 0.0
        %2437 = vmatpush.msra.mxu0 0.0
        %2438 = vmatpush.msra.mxu0 0.0
        %2439 = vmatpush.msra.mxu0 0.0
        %2440 = vmatpush.msra.mxu0 0.0
        %2441 = vmatpush.msra.mxu0 0.0
        %2442 = vmatpush.msra.mxu0 0.0
        %2443 = vmatpush.msra.mxu0 0.0
        %2444 = vmatpush.msra.mxu0 0.0
        %2445 = vmatpush.msra.mxu0 0.0
        %v2446 = vand.u32 %v551, 4294901760
        %v2447 = vsub.f32 %v551, %v2446
        %v2448 = vand.u32 %v2447, 4294901760
        %v2449 = vsub.f32 %v2447, %v2448
        %v2450 = vand.u32 %v2449, 4294901760
        %2451 = vmatpush.msra.mxu0 %v2450
        %v2452 = vand.u32 %v550, 4294901760
        %v2453 = vsub.f32 %v550, %v2452
        %v2454 = vand.u32 %v2453, 4294901760
        %v2455 = vsub.f32 %v2453, %v2454
        %v2456 = vand.u32 %v2455, 4294901760
        %2457 = vmatpush.msra.mxu0 %v2456
        %v2458 = vand.u32 %v2403, 4294901760
        %2459 = vmatmul.f32.gmra.mxu0 %v2458
        %v2460 = vpop.f32.mrf.mxu0
        %v2461 = vadd.f32 %v2430, %v2460
        %2462 = vdwg.mxu0
        %2463 = vmatpush.msra.mxu0 0.0
        %2464 = vmatpush.msra.mxu0 0.0
        %2465 = vmatpush.msra.mxu0 0.0
        %2466 = vmatpush.msra.mxu0 0.0
        %2467 = vmatpush.msra.mxu0 0.0
        %2468 = vmatpush.msra.mxu0 0.0
        %2469 = vmatpush.msra.mxu0 0.0
        %2470 = vmatpush.msra.mxu0 0.0
        %2471 = vmatpush.msra.mxu0 0.0
        %2472 = vmatpush.msra.mxu0 0.0
        %2473 = vmatpush.msra.mxu0 0.0
        %2474 = vmatpush.msra.mxu0 0.0
        %2475 = vmatpush.msra.mxu0 0.0
        %2476 = vmatpush.msra.mxu0 0.0
        %v2477 = vand.u32 %v551, 4294901760
        %v2478 = vsub.f32 %v551, %v2477
        %2479 = vmatpush.msra.mxu0 %v2478
        %v2480 = vand.u32 %v550, 4294901760
        %v2481 = vsub.f32 %v550, %v2480
        %2482 = vmatpush.msra.mxu0 %v2481
        %v2483 = vand.u32 %v2403, 4294901760
        %v2484 = vsub.f32 %v2403, %v2483
        %2485 = vmatmul.f32.gmra.mxu0 %v2484
        %v2486 = vpop.f32.mrf.mxu0
        %v2487 = vadd.f32 %v2461, %v2486
        %2488 = vdwg.mxu0
        %2489 = vmatpush.msra.mxu0 0.0
        %2490 = vmatpush.msra.mxu0 0.0
        %2491 = vmatpush.msra.mxu0 0.0
        %2492 = vmatpush.msra.mxu0 0.0
        %2493 = vmatpush.msra.mxu0 0.0
        %2494 = vmatpush.msra.mxu0 0.0
        %2495 = vmatpush.msra.mxu0 0.0
        %2496 = vmatpush.msra.mxu0 0.0
        %2497 = vmatpush.msra.mxu0 0.0
        %2498 = vmatpush.msra.mxu0 0.0
        %2499 = vmatpush.msra.mxu0 0.0
        %2500 = vmatpush.msra.mxu0 0.0
        %2501 = vmatpush.msra.mxu0 0.0
        %2502 = vmatpush.msra.mxu0 0.0
        %v2503 = vand.u32 %v551, 4294901760
        %2504 = vmatpush.msra.mxu0 %v2503
        %v2505 = vand.u32 %v550, 4294901760
        %2506 = vmatpush.msra.mxu0 %v2505
        %v2507 = vand.u32 %v2403, 4294901760
        %v2508 = vsub.f32 %v2403, %v2507
        %v2509 = vand.u32 %v2508, 4294901760
        %2510 = vmatmul.f32.gmra.mxu0 %v2509
        %v2511 = vpop.f32.mrf.mxu0
        %v2512 = vadd.f32 %v2487, %v2511
        %2513 = vdwg.mxu0
        %2514 = vmatpush.msra.mxu0 0.0
        %2515 = vmatpush.msra.mxu0 0.0
        %2516 = vmatpush.msra.mxu0 0.0
        %2517 = vmatpush.msra.mxu0 0.0
        %2518 = vmatpush.msra.mxu0 0.0
        %2519 = vmatpush.msra.mxu0 0.0
        %2520 = vmatpush.msra.mxu0 0.0
        %2521 = vmatpush.msra.mxu0 0.0
        %2522 = vmatpush.msra.mxu0 0.0
        %2523 = vmatpush.msra.mxu0 0.0
        %2524 = vmatpush.msra.mxu0 0.0
        %2525 = vmatpush.msra.mxu0 0.0
        %2526 = vmatpush.msra.mxu0 0.0
        %2527 = vmatpush.msra.mxu0 0.0
        %v2528 = vand.u32 %v551, 4294901760
        %v2529 = vsub.f32 %v551, %v2528
        %v2530 = vand.u32 %v2529, 4294901760
        %2531 = vmatpush.msra.mxu0 %v2530
        %v2532 = vand.u32 %v550, 4294901760
        %v2533 = vsub.f32 %v550, %v2532
        %v2534 = vand.u32 %v2533, 4294901760
        %2535 = vmatpush.msra.mxu0 %v2534
        %v2536 = vand.u32 %v2403, 4294901760
        %2537 = vmatmul.f32.gmra.mxu0 %v2536
        %v2538 = vpop.f32.mrf.mxu0
        %v2539 = vadd.f32 %v2512, %v2538
        %2540 = vdwg.mxu0
        %2541 = vmatpush.msra.mxu0 0.0
        %2542 = vmatpush.msra.mxu0 0.0
        %2543 = vmatpush.msra.mxu0 0.0
        %2544 = vmatpush.msra.mxu0 0.0
        %2545 = vmatpush.msra.mxu0 0.0
        %2546 = vmatpush.msra.mxu0 0.0
        %2547 = vmatpush.msra.mxu0 0.0
        %2548 = vmatpush.msra.mxu0 0.0
        %2549 = vmatpush.msra.mxu0 0.0
        %2550 = vmatpush.msra.mxu0 0.0
        %2551 = vmatpush.msra.mxu0 0.0
        %2552 = vmatpush.msra.mxu0 0.0
        %2553 = vmatpush.msra.mxu0 0.0
        %2554 = vmatpush.msra.mxu0 0.0
        %v2555 = vand.u32 %v551, 4294901760
        %2556 = vmatpush.msra.mxu0 %v2555
        %v2557 = vand.u32 %v550, 4294901760
        %2558 = vmatpush.msra.mxu0 %v2557
        %v2559 = vand.u32 %v2403, 4294901760
        %2560 = vmatmul.f32.gmra.mxu0 %v2559
        %v2561 = vpop.f32.mrf.mxu0
        %v2562 = vadd.f32 %v2539, %v2561
        %2563 = vdwg.mxu0
        %v2565 = vsel %vm2239, %v2238, 0
        %2567 = vmatpush.msra.mxu0 0.0
        %2568 = vmatpush.msra.mxu0 0.0
        %2569 = vmatpush.msra.mxu0 0.0
        %2570 = vmatpush.msra.mxu0 0.0
        %2571 = vmatpush.msra.mxu0 0.0
        %2572 = vmatpush.msra.mxu0 0.0
        %2573 = vmatpush.msra.mxu0 0.0
        %2574 = vmatpush.msra.mxu0 0.0
        %2575 = vmatpush.msra.mxu0 0.0
        %2576 = vmatpush.msra.mxu0 0.0
        %2577 = vmatpush.msra.mxu0 0.0
        %2578 = vmatpush.msra.mxu0 0.0
        %2579 = vmatpush.msra.mxu0 0.0
        %2580 = vmatpush.msra.mxu0 0.0
        %v2581 = vand.u32 %v551, 4294901760
        %2582 = vmatpush.msra.mxu0 %v2581
        %v2583 = vand.u32 %v550, 4294901760
        %2584 = vmatpush.msra.mxu0 %v2583
        %v2585 = vand.u32 %v2565, 4294901760
        %v2586 = vsub.f32 %v2565, %v2585
        %v2587 = vand.u32 %v2586, 4294901760
        %v2588 = vsub.f32 %v2586, %v2587
        %v2589 = vand.u32 %v2588, 4294901760
        %2590 = vmatmul.f32.gmra.mxu0 %v2589
        %v2591 = vpop.f32.mrf.mxu0
        %v2592 = vadd.f32 0.0, %v2591
        %2593 = vdwg.mxu0
        %2594 = vmatpush.msra.mxu0 0.0
        %2595 = vmatpush.msra.mxu0 0.0
        %2596 = vmatpush.msra.mxu0 0.0
        %2597 = vmatpush.msra.mxu0 0.0
        %2598 = vmatpush.msra.mxu0 0.0
        %2599 = vmatpush.msra.mxu0 0.0
        %2600 = vmatpush.msra.mxu0 0.0
        %2601 = vmatpush.msra.mxu0 0.0
        %2602 = vmatpush.msra.mxu0 0.0
        %2603 = vmatpush.msra.mxu0 0.0
        %2604 = vmatpush.msra.mxu0 0.0
        %2605 = vmatpush.msra.mxu0 0.0
        %2606 = vmatpush.msra.mxu0 0.0
        %2607 = vmatpush.msra.mxu0 0.0
        %v2608 = vand.u32 %v551, 4294901760
        %v2609 = vsub.f32 %v551, %v2608
        %v2610 = vand.u32 %v2609, 4294901760
        %v2611 = vsub.f32 %v2609, %v2610
        %v2612 = vand.u32 %v2611, 4294901760
        %2613 = vmatpush.msra.mxu0 %v2612
        %v2614 = vand.u32 %v550, 4294901760
        %v2615 = vsub.f32 %v550, %v2614
        %v2616 = vand.u32 %v2615, 4294901760
        %v2617 = vsub.f32 %v2615, %v2616
        %v2618 = vand.u32 %v2617, 4294901760
        %2619 = vmatpush.msra.mxu0 %v2618
        %v2620 = vand.u32 %v2565, 4294901760
        %2621 = vmatmul.f32.gmra.mxu0 %v2620
        %v2622 = vpop.f32.mrf.mxu0
        %v2623 = vadd.f32 %v2592, %v2622
        %2624 = vdwg.mxu0
        %2625 = vmatpush.msra.mxu0 0.0
        %2626 = vmatpush.msra.mxu0 0.0
        %2627 = vmatpush.msra.mxu0 0.0
        %2628 = vmatpush.msra.mxu0 0.0
        %2629 = vmatpush.msra.mxu0 0.0
        %2630 = vmatpush.msra.mxu0 0.0
        %2631 = vmatpush.msra.mxu0 0.0
        %2632 = vmatpush.msra.mxu0 0.0
        %2633 = vmatpush.msra.mxu0 0.0
        %2634 = vmatpush.msra.mxu0 0.0
        %2635 = vmatpush.msra.mxu0 0.0
        %2636 = vmatpush.msra.mxu0 0.0
        %2637 = vmatpush.msra.mxu0 0.0
        %2638 = vmatpush.msra.mxu0 0.0
        %v2639 = vand.u32 %v551, 4294901760
        %v2640 = vsub.f32 %v551, %v2639
        %2641 = vmatpush.msra.mxu0 %v2640
        %v2642 = vand.u32 %v550, 4294901760
        %v2643 = vsub.f32 %v550, %v2642
        %2644 = vmatpush.msra.mxu0 %v2643
        %v2645 = vand.u32 %v2565, 4294901760
        %v2646 = vsub.f32 %v2565, %v2645
        %2647 = vmatmul.f32.gmra.mxu0 %v2646
        %v2648 = vpop.f32.mrf.mxu0
        %v2649 = vadd.f32 %v2623, %v2648
        %2650 = vdwg.mxu0
        %2651 = vmatpush.msra.mxu0 0.0
        %2652 = vmatpush.msra.mxu0 0.0
        %2653 = vmatpush.msra.mxu0 0.0
        %2654 = vmatpush.msra.mxu0 0.0
        %2655 = vmatpush.msra.mxu0 0.0
        %2656 = vmatpush.msra.mxu0 0.0
        %2657 = vmatpush.msra.mxu0 0.0
        %2658 = vmatpush.msra.mxu0 0.0
        %2659 = vmatpush.msra.mxu0 0.0
        %2660 = vmatpush.msra.mxu0 0.0
        %2661 = vmatpush.msra.mxu0 0.0
        %2662 = vmatpush.msra.mxu0 0.0
        %2663 = vmatpush.msra.mxu0 0.0
        %2664 = vmatpush.msra.mxu0 0.0
        %v2665 = vand.u32 %v551, 4294901760
        %2666 = vmatpush.msra.mxu0 %v2665
        %v2667 = vand.u32 %v550, 4294901760
        %2668 = vmatpush.msra.mxu0 %v2667
        %v2669 = vand.u32 %v2565, 4294901760
        %v2670 = vsub.f32 %v2565, %v2669
        %v2671 = vand.u32 %v2670, 4294901760
        %2672 = vmatmul.f32.gmra.mxu0 %v2671
        %v2673 = vpop.f32.mrf.mxu0
        %v2674 = vadd.f32 %v2649, %v2673
        %2675 = vdwg.mxu0
        %2676 = vmatpush.msra.mxu0 0.0
        %2677 = vmatpush.msra.mxu0 0.0
        %2678 = vmatpush.msra.mxu0 0.0
        %2679 = vmatpush.msra.mxu0 0.0
        %2680 = vmatpush.msra.mxu0 0.0
        %2681 = vmatpush.msra.mxu0 0.0
        %2682 = vmatpush.msra.mxu0 0.0
        %2683 = vmatpush.msra.mxu0 0.0
        %2684 = vmatpush.msra.mxu0 0.0
        %2685 = vmatpush.msra.mxu0 0.0
        %2686 = vmatpush.msra.mxu0 0.0
        %2687 = vmatpush.msra.mxu0 0.0
        %2688 = vmatpush.msra.mxu0 0.0
        %2689 = vmatpush.msra.mxu0 0.0
        %v2690 = vand.u32 %v551, 4294901760
        %v2691 = vsub.f32 %v551, %v2690
        %v2692 = vand.u32 %v2691, 4294901760
        %2693 = vmatpush.msra.mxu0 %v2692
        %v2694 = vand.u32 %v550, 4294901760
        %v2695 = vsub.f32 %v550, %v2694
        %v2696 = vand.u32 %v2695, 4294901760
        %2697 = vmatpush.msra.mxu0 %v2696
        %v2698 = vand.u32 %v2565, 4294901760
        %2699 = vmatmul.f32.gmra.mxu0 %v2698
        %v2700 = vpop.f32.mrf.mxu0
        %v2701 = vadd.f32 %v2674, %v2700
        %2702 = vdwg.mxu0
        %2703 = vmatpush.msra.mxu0 0.0
        %2704 = vmatpush.msra.mxu0 0.0
        %2705 = vmatpush.msra.mxu0 0.0
        %2706 = vmatpush.msra.mxu0 0.0
        %2707 = vmatpush.msra.mxu0 0.0
        %2708 = vmatpush.msra.mxu0 0.0
        %2709 = vmatpush.msra.mxu0 0.0
        %2710 = vmatpush.msra.mxu0 0.0
        %2711 = vmatpush.msra.mxu0 0.0
        %2712 = vmatpush.msra.mxu0 0.0
        %2713 = vmatpush.msra.mxu0 0.0
        %2714 = vmatpush.msra.mxu0 0.0
        %2715 = vmatpush.msra.mxu0 0.0
        %2716 = vmatpush.msra.mxu0 0.0
        %v2717 = vand.u32 %v551, 4294901760
        %2718 = vmatpush.msra.mxu0 %v2717
        %v2719 = vand.u32 %v550, 4294901760
        %2720 = vmatpush.msra.mxu0 %v2719
        %v2721 = vand.u32 %v2565, 4294901760
        %2722 = vmatmul.f32.gmra.mxu0 %v2721
        %v2723 = vpop.f32.mrf.mxu0
        %v2724 = vadd.f32 %v2701, %v2723
        %2725 = vdwg.mxu0
        %2726 = vst.msk [vmem:[%s531] sm:$0x3] %vm2163, %v2075
        %2727 = vst.msk [vmem:[%s531 + $0xc] sm:$0x3] %vm2163, %v2076
        %2728 = vst.msk [vmem:[%s531 + $0x18] sm:$0x3] %vm2163, %v2077
        %s2729 = scalar_lea.vmem %s531, 2 [#allocation14]
        %2730 = vst.msk [vmem:[%s2729] sm:$0x3] %vm2163, %v2208
        %2731 = vst.msk [vmem:[%s2729 + $0xc] sm:$0x3] %vm2163, %v2223
        %2732 = vst.msk [vmem:[%s2729 + $0x18] sm:$0x3] %vm2163, %v2238
        %s2733 = scalar_lea.vmem %s531, 4 [#allocation14]
        %2734 = vst.msk [vmem:[%s2733] sm:$0x3] %vm2163, %v2151
        %2735 = vst.msk [vmem:[%s2733 + $0xc] sm:$0x3] %vm2163, %v2152
        %2736 = vst.msk [vmem:[%s2733 + $0x18] sm:$0x3] %vm2163, %v2153
        %s2737 = scalar_lea.vmem %s531, 6 [#allocation14]
        %2738 = vst.msk [vmem:[%s2737] sm:$0x3] %vm2163, %v2400
        %2739 = vst.msk [vmem:[%s2737 + $0xc] sm:$0x3] %vm2163, %v2562
        %2740 = vst.msk [vmem:[%s2737 + $0x18] sm:$0x3] %vm2163, %v2724
        %s2741 = scalar_lea.vmem %s531, 8 [#allocation14]
        %2742 = vst.msk [vmem:[%s2741] sm:$0x3] %vm2163, %v1266
        %2743 = vst.msk [vmem:[%s2741 + $0xc] sm:$0x3] %vm2163, %v1425
        %2744 = vst.msk [vmem:[%s2741 + $0x18] sm:$0x3] %vm2163, %v1584
        %s2745 = scalar_lea.vmem %s531, 10 [#allocation14]
        %2746 = vst.msk [vmem:[%s2745] sm:$0x3] %vm2163, %v2087
        %2747 = vst.msk [vmem:[%s2745 + $0xc] sm:$0x3] %vm2163, %v2088
        %2748 = vst.msk [vmem:[%s2745 + $0x18] sm:$0x3] %vm2163, %v2089
        %s2749 = sand.u32 %s256, 1
        %s2750 = scalar_lea.sflag [#allocation5], %s2749
        %s2751 = sand.u32 %s256, 1
        %s2752 = smul.addr %s2751, 36
        %s2753 = scalar_lea.vmem [#allocation14], %s2752
        // Predicated region
        $region81: #{tpu_custom_call.1} parent=55 // pred_check
          %p2754 = pneg %p266
        $region82: #{tpu_custom_call.1} parent=55 // pred_check_branch
          %2756 = sbr.rel (%p2754) target = $region84
        $region83: #{tpu_custom_call.1} parent=55 // pred_region
          %s2757 = smul.u32 3, %s34
          %2759 = vsyncadd %s2750, 0
          %s2760 = smul.addr %s2757, 6
          %s2761 = smul.addr %s2760, 2
          %s2762 = scalar_lea.hbm %s9, %s2761
          %s2763 = sshll.u32 %s2753, 4
          %s2764 = int_to_ptr.vmem [resolvable:$true] %s2763
          %s2765 = sshll.u32 %s2762, 4
          %s2766 = int_to_ptr.hbm [resolvable:$true] %s2765
          %2771 = dma.vmem_to_hbm [thread:$0]  %s2764, 576, %s2766, %s2750, 32, 32, 2
        $region84: #{tpu_custom_call.1} parent=55 // pred_fallthru
          _
      $region56: #{tpu_custom_call.1} parent=5 // pred_fallthru
        _
      %p2772 = scmp.le.s32.totalorder 2, %s29
      // Predicated region
      $region85: #{tpu_custom_call.1} parent=5 // pred_check
        %p2773 = pneg %p2772
      $region86: #{tpu_custom_call.1} parent=5 // pred_check_branch
        %2775 = sbr.rel (%p2773) target = $region88
      $region87: #{tpu_custom_call.1} parent=5 // pred_region
        %s2776 = ssub.s32 %s29, 2
        // Predicated region
        $region89: #{tpu_custom_call.1} parent=87 // pred_check
          %p2777 = pneg %p272
        $region90: #{tpu_custom_call.1} parent=87 // pred_check_branch
          %2779 = sbr.rel (%p2777) target = $region92
        $region91: #{tpu_custom_call.1} parent=87 // pred_region
          %s2780 = sand.u32 %s257, 1
          %s2781 = scalar_lea.sflag [#allocation5], %s2780
          %s2782 = sand.u32 %s257, 1
          %s2783 = smul.addr %s2782, 36
          %s2784 = scalar_lea.vmem [#allocation14], %s2783
          %2786 = dma.done %s2781, 576
        $region92: #{tpu_custom_call.1} parent=87 // pred_fallthru
          _
      $region88: #{tpu_custom_call.1} parent=5 // pred_fallthru
        _
    $region6: #{tpu_custom_call.1} parent=1 // loop_footer
      %s33 = sadd.s32 1, %s29
    $region7: #{tpu_custom_call.1} parent=1 // loop_footer_branch
      %28 = sbr.rel target = $region3
    $region8: #{tpu_custom_call.1} parent=1 // loop_exit
      _
    %2787 = vsyncpa [#allocation4], 1
    %s2788 = scalar_lea.sflag [#allocation4], 1
    %2789 = vsyncpa %s2788, 1
    %2790 = vsyncpa [#allocation7], 1
    %s2791 = scalar_lea.sflag [#allocation7], 1
    %2792 = vsyncpa %s2791, 1
    %2793 = vsyncpa [#allocation10], 1
    %s2794 = scalar_lea.sflag [#allocation10], 1
    %2795 = vsyncpa %s2794, 1
    %2796 = vsyncpa [#allocation13], 1
    %2797 = vsyncpa [#allocation5], 1
    %s2798 = scalar_lea.sflag [#allocation5], 1
    %2799 = vsyncpa %s2798, 1

</llo_original>
